<compile_context>
chip_gen: v6e
topology: v6e:2x2x1
jax: 0.10.0
libtpu: 0.0.40
codegen_flags: <defaults>
</compile_context>

<pallas_src>
import jax
import jax.numpy as jnp
from jax.experimental import pallas as pl
from jax.experimental.pallas import tpu as pltpu


# ----------------------------------------------------------------------------
# Kernel 1: GRU cell + Luong 'dot' attention + tanh(concat Linear). Runs once.
# ----------------------------------------------------------------------------
def recurrent_attn_kernel(emb_ref, h_ref, enc_ref,
                          wih_ref, whh_ref, bih_ref, bhh_ref,
                          wc_h_ref, wc_c_ref, bc_ref,
                          concat_ref, hid_ref):
    Hp = h_ref.shape[-1]                      # padded hidden size (multiple of 128)
    x16 = emb_ref[...]                        # (B, H) bf16; embedding dropout == identity (eval)
    h = h_ref[...]                            # (B, H) f32 previous hidden
    h16 = h.astype(jnp.bfloat16)

    # ---- GRU cell: two fused (B,H) @ (H,3H) MXU matmuls --------------------------------
    gi = jnp.dot(x16, wih_ref[...], preferred_element_type=jnp.float32) + bih_ref[...]
    gh = jnp.dot(h16, whh_ref[...], preferred_element_type=jnp.float32) + bhh_ref[...]
    r = jax.nn.sigmoid(gi[:, :Hp] + gh[:, :Hp])
    z = jax.nn.sigmoid(gi[:, Hp:2 * Hp] + gh[:, Hp:2 * Hp])
    n = jnp.tanh(gi[:, 2 * Hp:] + r * gh[:, 2 * Hp:])
    h_new = (1.0 - z) * n + z * h             # rnn_output, (B, H) f32
    hid_ref[...] = h_new

    # ---- Luong 'dot' attention ----------------------------------------------------------
    enc = enc_ref[...]                        # (B, S, H) bf16
    # Scores: M=1 per-batch contraction over the lane dim -> VPU multiply + lane reduce
    # (avoids per-batch (S,H)->(H,S) XLU transposes an MXU einsum would induce).
    scores = jnp.sum(enc * h_new[:, None, :], axis=-1)                        # (B, S) f32
    scores = scores - jnp.max(scores, axis=-1, keepdims=True)
    e = jnp.exp(scores)
    attn = e * pl.reciprocal(jnp.sum(e, axis=-1, keepdims=True), approx=True)
    # Context: contraction over S maps cleanly to the MXU (no hidden transposes).
    context = jnp.einsum("bqs,bsh->bqh", attn[:, None, :].astype(jnp.bfloat16), enc,
                         preferred_element_type=jnp.float32)[:, 0, :]         # (B, H) f32

    # ---- concat -> tanh(Linear(2H -> H)); weight pre-split, no lane concatenation -------
    concat_out = jnp.tanh(
        jnp.dot(h_new.astype(jnp.bfloat16), wc_h_ref[...],
                preferred_element_type=jnp.float32)
        + jnp.dot(context.astype(jnp.bfloat16), wc_c_ref[...],
                  preferred_element_type=jnp.float32)
        + bc_ref[...])
    concat_ref[...] = concat_out.astype(jnp.bfloat16)


# ----------------------------------------------------------------------------
# Kernel 2: vocab-tiled output projection (pure weight streaming, parallel grid).
# ----------------------------------------------------------------------------
def out_proj_kernel(concat_ref, wo_ref, bo_ref, logits_ref):
    logits_ref[...] = (jnp.dot(concat_ref[...], wo_ref[...],
                               preferred_element_type=jnp.float32) + bo_ref[...])


# ----------------------------------------------------------------------------
# Wrapper: padding, weight fusion, bf16 casts, vocab tiling
# ----------------------------------------------------------------------------
def _round_up(x, m):
    return (x + m - 1) // m * m


def _pad2(a, rows, cols):
    return jnp.pad(a, ((0, rows - a.shape[0]), (0, cols - a.shape[1])))


def luong_decoder_forward(params, input_step, last_hidden, encoder_outputs, *, tile_o=8192):
    """input_step: (1, B) int32, last_hidden: (1, B, H), encoder_outputs: (S, B, H)."""
    H, O = params["w_out"].shape

    # Embedding gather as plain-JAX glue; dropout treated as identity (eval mode).
    emb = params["embedding"][input_step[0]]                   # (B, H)
    h0 = last_hidden[0]                                        # (B, H)
    # TODO(synk): hoist this transpose out of the per-step loop in a multi-step decoder.
    enc = jnp.transpose(encoder_outputs, (1, 0, 2))            # (B, S, H)
    B, S, _ = enc.shape

    # Lane dims -> multiple of 128; batch -> multiple of 16 (full bf16 sublane pack).
    B_pad = _round_up(B, 16)
    H_pad = _round_up(H, 128)
    O_pad = _round_up(O, 128)
    tile_o = min(tile_o, O_pad)
    O_pad = _round_up(O_pad, tile_o)
    n_tiles = O_pad // tile_o

    f32, bf16 = jnp.float32, jnp.bfloat16

    emb_p = _pad2(emb, B_pad, H_pad).astype(bf16)
    h_p = _pad2(h0, B_pad, H_pad).astype(f32)
    enc_p = jnp.pad(enc, ((0, B_pad - B), (0, 0), (0, H_pad - H))).astype(bf16)

    # Fused GRU weights: gate blocks padded individually so they sit at lane offsets k*H_pad.
    wih_f = jnp.concatenate([_pad2(params["w_ih"][g], H_pad, H_pad) for g in range(3)],
                            axis=1).astype(bf16)               # (H_pad, 3*H_pad)
    whh_f = jnp.concatenate([_pad2(params["w_hh"][g], H_pad, H_pad) for g in range(3)],
                            axis=1).astype(bf16)
    bih_f = jnp.concatenate([jnp.pad(params["b_ih"][g], (0, H_pad - H)) for g in range(3)]
                            )[None, :].astype(f32)             # (1, 3*H_pad)
    bhh_f = jnp.concatenate([jnp.pad(params["b_hh"][g], (0, H_pad - H)) for g in range(3)]
                            )[None, :].astype(f32)

    wc_h = _pad2(params["w_concat_h"], H_pad, H_pad).astype(bf16)
    wc_c = _pad2(params["w_concat_c"], H_pad, H_pad).astype(bf16)
    bc = jnp.pad(params["b_concat"], (0, H_pad - H))[None, :].astype(f32)

    wo = _pad2(params["w_out"], H_pad, O_pad).astype(bf16)
    bo = jnp.pad(params["b_out"], (0, O_pad - O))[None, :].astype(f32)

    def whole(shape):
        return pl.BlockSpec(shape, lambda i, _s=shape: (0,) * len(_s))

    # ---- Call 1: recurrent + attention + concat (small, runs once) ----------------------
    concat_out, h_new_p = pl.pallas_call(
        recurrent_attn_kernel,
        grid=(1,),
        out_shape=(jax.ShapeDtypeStruct((B_pad, H_pad), bf16),   # concat_out
                   jax.ShapeDtypeStruct((B_pad, H_pad), f32)),   # new hidden
        in_specs=[
            whole((B_pad, H_pad)),                              # emb
            whole((B_pad, H_pad)),                              # h0
            whole((B_pad, S, H_pad)),                           # encoder outputs
            whole((H_pad, 3 * H_pad)),                          # fused W_ih
            whole((H_pad, 3 * H_pad)),                          # fused W_hh
            whole((1, 3 * H_pad)),                              # fused b_ih
            whole((1, 3 * H_pad)),                              # fused b_hh
            whole((H_pad, H_pad)),                              # concat W (rnn part)
            whole((H_pad, H_pad)),                              # concat W (context part)
            whole((1, H_pad)),                                  # concat bias
        ],
        out_specs=(whole((B_pad, H_pad)),
                   whole((B_pad, H_pad))),
        compiler_params=pltpu.CompilerParams(
            dimension_semantics=("arbitrary",),
            vmem_limit_bytes=48 * 1024 * 1024),
    )(emb_p, h_p, enc_p, wih_f, whh_f, bih_f, bhh_f, wc_h, wc_c, bc)

    # ---- Call 2: vocab-tiled output projection ------------------------------------------
    # Only concat_out + one wo/bo tile + one logits tile live in VMEM, so the vocab grid
    # axis is "parallel" (shards across TensorCores on v7x; no-op on v5e/v6e).
    # Per-generation tuning: sweep tile_o 4096-16384 and vmem_limit 64-96 MiB on v5e/v6e;
    # on v7x (64 MiB VMEM) keep tile_o <= 4096 and prefer pipeline_mode=pl.Buffered(3)
    # on the wo/bo specs over larger tiles.
    logits_p = pl.pallas_call(
        out_proj_kernel,
        grid=(n_tiles,),
        out_shape=jax.ShapeDtypeStruct((B_pad, O_pad), f32),
        in_specs=[
            pl.BlockSpec((B_pad, H_pad), lambda j: (0, 0)),     # concat_out (VMEM-resident)
            pl.BlockSpec((H_pad, tile_o), lambda j: (0, j)),    # w_out tile (streamed)
            pl.BlockSpec((1, tile_o), lambda j: (0, j)),        # b_out tile
        ],
        out_specs=pl.BlockSpec((B_pad, tile_o), lambda j: (0, j)),
        compiler_params=pltpu.CompilerParams(
            dimension_semantics=("parallel",),
            vmem_limit_bytes=48 * 1024 * 1024),
    )(concat_out, wo, bo)

    logits = logits_p[:B, :O]
    # Softmax over the REAL vocab lanes only (padded columns must not enter the softmax).
    # TODO(synk): fuse the softmax as a second pass over the vocab tiles for large O / B.
    output = jax.nn.softmax(logits, axis=1)
    hidden = h_new_p[:B, :H][None]                              # (1, B, H)
    return output, hidden


# ----------------------------------------------------------------------------
# Pure-JAX f32 reference (same math) for correctness checking.
# ----------------------------------------------------------------------------
def reference_forward(params, input_step, last_hidden, encoder_outputs):
    emb = params["embedding"][input_step[0]]
    h = last_hidden[0]
    enc = jnp.transpose(encoder_outputs, (1, 0, 2))

    gi = [emb @ params["w_ih"][g] + params["b_ih"][g] for g in range(3)]
    gh = [h @ params["w_hh"][g] + params["b_hh"][g] for g in range(3)]
    r = jax.nn.sigmoid(gi[0] + gh[0])
    z = jax.nn.sigmoid(gi[1] + gh[1])
    n = jnp.tanh(gi[2] + r * gh[2])
    h_new = (1.0 - z) * n + z * h

    scores = jnp.einsum("bh,bsh->bs", h_new, enc)
    attn = jax.nn.softmax(scores, axis=1)
    context = jnp.einsum("bs,bsh->bh", attn, enc)

    concat_out = jnp.tanh(h_new @ params["w_concat_h"]
                          + context @ params["w_concat_c"] + params["b_concat"])
    logits = concat_out @ params["w_out"] + params["b_out"]
    return jax.nn.softmax(logits, axis=1), h_new[None]


# ----------------------------------------------------------------------------
# Parameter init + demo
# ----------------------------------------------------------------------------
def init_params(key, vocab_size, hidden_size, output_size):
    ks = jax.random.split(key, 10)
    s = 0.1
    H, O = hidden_size, output_size
    return {
        "embedding": s * jax.random.normal(ks[0], (vocab_size, H), jnp.float32),
        # GRU weights in x @ W convention (already transposed vs. PyTorch), per gate r/z/n
        "w_ih": s * jax.random.normal(ks[1], (3, H, H), jnp.float32),
        "w_hh": s * jax.random.normal(ks[2], (3, H, H), jnp.float32),
        "b_ih": s * jax.random.normal(ks[3], (3, H), jnp.float32),
        "b_hh": s * jax.random.normal(ks[4], (3, H), jnp.float32),
        # concat Linear (2H -> H), split into rnn-output part and context part, transposed
        "w_concat_h": s * jax.random.normal(ks[5], (H, H), jnp.float32),
        "w_concat_c": s * jax.random.normal(ks[6], (H, H), jnp.float32),
        "b_concat": s * jax.random.normal(ks[7], (H,), jnp.float32),
        # out Linear (H -> O), transposed
        "w_out": s * jax.random.normal(ks[8], (H, O), jnp.float32),
        "b_out": s * jax.random.normal(ks[9], (O,), jnp.float32),
    }


if __name__ == "__main__":
    B, S, H, V = 4, 8, 32, 16      # batch, src seq len, hidden_size, vocab/output_size
    key = jax.random.PRNGKey(0)
    kp, k1, k2, k3 = jax.random.split(key, 4)

    params = init_params(kp, V, H, V)
    input_step = jax.random.randint(k1, (1, B), 0, V, dtype=jnp.int32)     # (1, B)
    last_hidden = jax.random.normal(k2, (1, B, H), jnp.float32)            # (n_layers=1, B, H)
    encoder_outputs = jax.random.normal(k3, (S, B, H), jnp.float32)        # (S, B, H)

    out, hidden = luong_decoder_forward(params, input_step, last_hidden, encoder_outputs)
    out = jax.block_until_ready(out)
    hidden = jax.block_until_ready(hidden)

    ref_out, ref_hidden = reference_forward(params, input_step, last_hidden, encoder_outputs)
    assert out.shape == (B, V) and hidden.shape == (1, B, H)
    # bf16 matmuls + approx reciprocal in the attention softmax -> relaxed tolerance vs f32 ref
    assert jnp.allclose(out, ref_out, atol=2e-2, rtol=2e-2), \
        float(jnp.max(jnp.abs(out - ref_out)))
    assert jnp.allclose(hidden, ref_hidden, atol=2e-2, rtol=2e-2), \
        float(jnp.max(jnp.abs(hidden - ref_hidden)))

    print("KERNEL_OK")
</pallas_src>

<mosaic_0001>
module attributes {stable_mosaic.version = 11 : i64} {
  func.func @recurrent_attn_kernel(%arg0: i32, %arg1: memref<16x128xbf16, #tpu.memory_space<vmem>>, %arg2: memref<16x128xf32, #tpu.memory_space<vmem>>, %arg3: memref<16x8x128xbf16, #tpu.memory_space<vmem>>, %arg4: memref<128x384xbf16, #tpu.memory_space<vmem>>, %arg5: memref<128x384xbf16, #tpu.memory_space<vmem>>, %arg6: memref<1x384xf32, #tpu.memory_space<vmem>>, %arg7: memref<1x384xf32, #tpu.memory_space<vmem>>, %arg8: memref<128x128xbf16, #tpu.memory_space<vmem>>, %arg9: memref<128x128xbf16, #tpu.memory_space<vmem>>, %arg10: memref<1x128xf32, #tpu.memory_space<vmem>>, %arg11: memref<16x128xbf16, #tpu.memory_space<vmem>>, %arg12: memref<16x128xf32, #tpu.memory_space<vmem>>) attributes {dimension_semantics = [#tpu.dimension_semantics<arbitrary>], iteration_bounds = array<i64: 1>, scalar_prefetch = 0 : i64, scratch_operands = 0 : i64, tpu.core_type = #tpu.core_type<tc>, window_params = [{pipeline_mode = #tpu.pipeline_mode<synchronous>, transform_indices = @transform_0, window_bounds = array<i64: 16, 128>}, {pipeline_mode = #tpu.pipeline_mode<synchronous>, transform_indices = @transform_1, window_bounds = array<i64: 16, 128>}, {pipeline_mode = #tpu.pipeline_mode<synchronous>, transform_indices = @transform_2, window_bounds = array<i64: 16, 8, 128>}, {pipeline_mode = #tpu.pipeline_mode<synchronous>, transform_indices = @transform_3, window_bounds = array<i64: 128, 384>}, {pipeline_mode = #tpu.pipeline_mode<synchronous>, transform_indices = @transform_4, window_bounds = array<i64: 128, 384>}, {pipeline_mode = #tpu.pipeline_mode<synchronous>, transform_indices = @transform_5, window_bounds = array<i64: 1, 384>}, {pipeline_mode = #tpu.pipeline_mode<synchronous>, transform_indices = @transform_6, window_bounds = array<i64: 1, 384>}, {pipeline_mode = #tpu.pipeline_mode<synchronous>, transform_indices = @transform_7, window_bounds = array<i64: 128, 128>}, {pipeline_mode = #tpu.pipeline_mode<synchronous>, transform_indices = @transform_8, window_bounds = array<i64: 128, 128>}, {pipeline_mode = #tpu.pipeline_mode<synchronous>, transform_indices = @transform_9, window_bounds = array<i64: 1, 128>}, {pipeline_mode = #tpu.pipeline_mode<synchronous>, transform_indices = @transform_10, window_bounds = array<i64: 16, 128>}, {pipeline_mode = #tpu.pipeline_mode<synchronous>, transform_indices = @transform_11, window_bounds = array<i64: 16, 128>}]} {
    %c0 = arith.constant 0 : index
    %c0_0 = arith.constant 0 : index
    %0 = vector.load %arg1[%c0, %c0_0] : memref<16x128xbf16, #tpu.memory_space<vmem>>, vector<16x128xbf16>
    %c0_1 = arith.constant 0 : index
    %c0_2 = arith.constant 0 : index
    %1 = vector.load %arg2[%c0_1, %c0_2] : memref<16x128xf32, #tpu.memory_space<vmem>>, vector<16x128xf32>
    %2 = arith.truncf %1 : vector<16x128xf32> to vector<16x128xbf16>
    %c0_3 = arith.constant 0 : index
    %c0_4 = arith.constant 0 : index
    %3 = vector.load %arg4[%c0_3, %c0_4] : memref<128x384xbf16, #tpu.memory_space<vmem>>, vector<128x384xbf16>
    %cst = arith.constant dense<0.000000e+00> : vector<16x384xf32>
    %4 = tpu.matmul %0, %3, %cst {dimension_numbers = #tpu.dot_dimension_numbers<[1], [0], [0], [1], [0, 0, 1, 1], [], []>} : vector<16x128xbf16>, vector<128x384xbf16>, vector<16x384xf32> -> vector<16x384xf32>
    %c0_5 = arith.constant 0 : index
    %c0_6 = arith.constant 0 : index
    %5 = vector.load %arg6[%c0_5, %c0_6] : memref<1x384xf32, #tpu.memory_space<vmem>>, vector<1x384xf32>
    %6 = vector.broadcast %5 : vector<1x384xf32> to vector<16x384xf32>
    %7 = arith.addf %4, %6 : vector<16x384xf32>
    %c0_7 = arith.constant 0 : index
    %c0_8 = arith.constant 0 : index
    %8 = vector.load %arg5[%c0_7, %c0_8] : memref<128x384xbf16, #tpu.memory_space<vmem>>, vector<128x384xbf16>
    %cst_9 = arith.constant dense<0.000000e+00> : vector<16x384xf32>
    %9 = tpu.matmul %2, %8, %cst_9 {dimension_numbers = #tpu.dot_dimension_numbers<[1], [0], [0], [1], [0, 0, 1, 1], [], []>} : vector<16x128xbf16>, vector<128x384xbf16>, vector<16x384xf32> -> vector<16x384xf32>
    %c0_10 = arith.constant 0 : index
    %c0_11 = arith.constant 0 : index
    %10 = vector.load %arg7[%c0_10, %c0_11] : memref<1x384xf32, #tpu.memory_space<vmem>>, vector<1x384xf32>
    %11 = vector.broadcast %10 : vector<1x384xf32> to vector<16x384xf32>
    %12 = arith.addf %9, %11 : vector<16x384xf32>
    %13 = vector.extract_strided_slice %7 {offsets = [0, 0], sizes = [16, 128], strides = [1, 1]} : vector<16x384xf32> to vector<16x128xf32>
    %14 = vector.extract_strided_slice %12 {offsets = [0, 0], sizes = [16, 128], strides = [1, 1]} : vector<16x384xf32> to vector<16x128xf32>
    %15 = arith.addf %13, %14 : vector<16x128xf32>
    %16 = arith.negf %15 : vector<16x128xf32>
    %17 = math.exp %16 : vector<16x128xf32>
    %cst_12 = arith.constant 1.000000e+00 : f32
    %18 = vector.broadcast %cst_12 : f32 to vector<16x128xf32>
    %19 = arith.addf %18, %17 : vector<16x128xf32>
    %20 = arith.divf %18, %19 : vector<16x128xf32>
    %21 = vector.extract_strided_slice %7 {offsets = [0, 128], sizes = [16, 128], strides = [1, 1]} : vector<16x384xf32> to vector<16x128xf32>
    %22 = vector.extract_strided_slice %12 {offsets = [0, 128], sizes = [16, 128], strides = [1, 1]} : vector<16x384xf32> to vector<16x128xf32>
    %23 = arith.addf %21, %22 : vector<16x128xf32>
    %24 = arith.negf %23 : vector<16x128xf32>
    %25 = math.exp %24 : vector<16x128xf32>
    %cst_13 = arith.constant 1.000000e+00 : f32
    %26 = vector.broadcast %cst_13 : f32 to vector<16x128xf32>
    %27 = arith.addf %26, %25 : vector<16x128xf32>
    %28 = arith.divf %26, %27 : vector<16x128xf32>
    %29 = vector.extract_strided_slice %7 {offsets = [0, 256], sizes = [16, 128], strides = [1, 1]} : vector<16x384xf32> to vector<16x128xf32>
    %30 = vector.extract_strided_slice %12 {offsets = [0, 256], sizes = [16, 128], strides = [1, 1]} : vector<16x384xf32> to vector<16x128xf32>
    %31 = arith.mulf %20, %30 : vector<16x128xf32>
    %32 = arith.addf %29, %31 : vector<16x128xf32>
    %33 = math.tanh %32 : vector<16x128xf32>
    %cst_14 = arith.constant 1.000000e+00 : f32
    %34 = vector.broadcast %cst_14 : f32 to vector<16x128xf32>
    %35 = arith.subf %34, %28 : vector<16x128xf32>
    %36 = arith.mulf %35, %33 : vector<16x128xf32>
    %37 = arith.mulf %28, %1 : vector<16x128xf32>
    %38 = arith.addf %36, %37 : vector<16x128xf32>
    %c0_15 = arith.constant 0 : index
    %c0_16 = arith.constant 0 : index
    %39 = vector.load %arg12[%c0_15, %c0_16] : memref<16x128xf32, #tpu.memory_space<vmem>>, vector<16x128xf32>
    tpu.vector_store %arg12[%c0_15, %c0_16], %38 {strides = array<i32>} : memref<16x128xf32, #tpu.memory_space<vmem>>, vector<16x128xf32>,
    %c0_17 = arith.constant 0 : index
    %c0_18 = arith.constant 0 : index
    %c0_19 = arith.constant 0 : index
    %40 = vector.load %arg3[%c0_17, %c0_18, %c0_19] : memref<16x8x128xbf16, #tpu.memory_space<vmem>>, vector<16x8x128xbf16>
    %41 = vector.shape_cast %38 : vector<16x128xf32> to vector<16x1x128xf32>
    %42 = arith.extf %40 : vector<16x8x128xbf16> to vector<16x8x128xf32>
    %43 = vector.broadcast %41 : vector<16x1x128xf32> to vector<16x8x128xf32>
    %44 = arith.mulf %42, %43 : vector<16x8x128xf32>
    %cst_20 = arith.constant dense<0.000000e+00> : vector<16x8xf32>
    %45 = vector.multi_reduction <add>, %44, %cst_20 [2] : vector<16x8x128xf32> to vector<16x8xf32>
    %cst_21 = arith.constant dense<0xFF800000> : vector<16xf32>
    %46 = vector.multi_reduction <maximumf>, %45, %cst_21 [1] : vector<16x8xf32> to vector<16xf32>
    %47 = vector.shape_cast %46 : vector<16xf32> to vector<16x1xf32>
    %48 = vector.broadcast %47 : vector<16x1xf32> to vector<16x8xf32>
    %49 = arith.subf %45, %48 : vector<16x8xf32>
    %50 = math.exp %49 : vector<16x8xf32>
    %cst_22 = arith.constant dense<0.000000e+00> : vector<16xf32>
    %51 = vector.multi_reduction <add>, %50, %cst_22 [1] : vector<16x8xf32> to vector<16xf32>
    %52 = vector.shape_cast %51 : vector<16xf32> to vector<16x1xf32>
    %53 = tpu.reciprocal %52 {approx = true} : vector<16x1xf32> -> vector<16x1xf32>
    %54 = vector.broadcast %53 : vector<16x1xf32> to vector<16x8xf32>
    %55 = arith.mulf %50, %54 : vector<16x8xf32>
    %56 = vector.shape_cast %55 : vector<16x8xf32> to vector<16x1x8xf32>
    %57 = arith.truncf %56 : vector<16x1x8xf32> to vector<16x1x8xbf16>
    "tpu.trace_start"() <{level = 10 : i32, message = "bqs,bsh->bqh"}> : () -> ()
    %cst_23 = arith.constant dense<0.000000e+00> : vector<16x1x128xf32>
    %58 = tpu.matmul %57, %40, %cst_23 {dimension_numbers = #tpu.dot_dimension_numbers<[2], [1], [1], [2], [0, 0, 0, 1, 1, 2], [0], [0]>} : vector<16x1x8xbf16>, vector<16x8x128xbf16>, vector<16x1x128xf32> -> vector<16x1x128xf32>
    "tpu.trace_stop"() : () -> ()
    %59 = vector.shape_cast %58 : vector<16x1x128xf32> to vector<16x128xf32>
    %60 = arith.truncf %38 : vector<16x128xf32> to vector<16x128xbf16>
    %c0_24 = arith.constant 0 : index
    %c0_25 = arith.constant 0 : index
    %61 = vector.load %arg8[%c0_24, %c0_25] : memref<128x128xbf16, #tpu.memory_space<vmem>>, vector<128x128xbf16>
    %cst_26 = arith.constant dense<0.000000e+00> : vector<16x128xf32>
    %62 = tpu.matmul %60, %61, %cst_26 {dimension_numbers = #tpu.dot_dimension_numbers<[1], [0], [0], [1], [0, 0, 1, 1], [], []>} : vector<16x128xbf16>, vector<128x128xbf16>, vector<16x128xf32> -> vector<16x128xf32>
    %63 = arith.truncf %59 : vector<16x128xf32> to vector<16x128xbf16>
    %c0_27 = arith.constant 0 : index
    %c0_28 = arith.constant 0 : index
    %64 = vector.load %arg9[%c0_27, %c0_28] : memref<128x128xbf16, #tpu.memory_space<vmem>>, vector<128x128xbf16>
    %cst_29 = arith.constant dense<0.000000e+00> : vector<16x128xf32>
    %65 = tpu.matmul %63, %64, %cst_29 {dimension_numbers = #tpu.dot_dimension_numbers<[1], [0], [0], [1], [0, 0, 1, 1], [], []>} : vector<16x128xbf16>, vector<128x128xbf16>, vector<16x128xf32> -> vector<16x128xf32>
    %66 = arith.addf %62, %65 : vector<16x128xf32>
    %c0_30 = arith.constant 0 : index
    %c0_31 = arith.constant 0 : index
    %67 = vector.load %arg10[%c0_30, %c0_31] : memref<1x128xf32, #tpu.memory_space<vmem>>, vector<1x128xf32>
    %68 = vector.broadcast %67 : vector<1x128xf32> to vector<16x128xf32>
    %69 = arith.addf %66, %68 : vector<16x128xf32>
    %70 = math.tanh %69 : vector<16x128xf32>
    %71 = arith.truncf %70 : vector<16x128xf32> to vector<16x128xbf16>
    %c0_32 = arith.constant 0 : index
    %c0_33 = arith.constant 0 : index
    %72 = vector.load %arg11[%c0_32, %c0_33] : memref<16x128xbf16, #tpu.memory_space<vmem>>, vector<16x128xbf16>
    tpu.vector_store %arg11[%c0_32, %c0_33], %71 {strides = array<i32>} : memref<16x128xbf16, #tpu.memory_space<vmem>>, vector<16x128xbf16>,
    return
  }
  func.func @transform_0(%arg0: i32) -> (i32, i32) {
    %c0_i32 = arith.constant 0 : i32
    %c0_i32_0 = arith.constant 0 : i32
    %c0_i32_1 = arith.constant 0 : i32
    return %c0_i32, %c0_i32_0 : i32, i32
  }
  func.func @transform_1(%arg0: i32) -> (i32, i32) {
    %c0_i32 = arith.constant 0 : i32
    %c0_i32_0 = arith.constant 0 : i32
    %c0_i32_1 = arith.constant 0 : i32
    return %c0_i32, %c0_i32_0 : i32, i32
  }
  func.func @transform_2(%arg0: i32) -> (i32, i32, i32) {
    %c0_i32 = arith.constant 0 : i32
    %c0_i32_0 = arith.constant 0 : i32
    %c0_i32_1 = arith.constant 0 : i32
    %c0_i32_2 = arith.constant 0 : i32
    return %c0_i32, %c0_i32_0, %c0_i32_1 : i32, i32, i32
  }
  func.func @transform_3(%arg0: i32) -> (i32, i32) {
    %c0_i32 = arith.constant 0 : i32
    %c0_i32_0 = arith.constant 0 : i32
    %c0_i32_1 = arith.constant 0 : i32
    return %c0_i32, %c0_i32_0 : i32, i32
  }
  func.func @transform_4(%arg0: i32) -> (i32, i32) {
    %c0_i32 = arith.constant 0 : i32
    %c0_i32_0 = arith.constant 0 : i32
    %c0_i32_1 = arith.constant 0 : i32
    return %c0_i32, %c0_i32_0 : i32, i32
  }
  func.func @transform_5(%arg0: i32) -> (i32, i32) {
    %c0_i32 = arith.constant 0 : i32
    %c0_i32_0 = arith.constant 0 : i32
    %c0_i32_1 = arith.constant 0 : i32
    return %c0_i32, %c0_i32_0 : i32, i32
  }
  func.func @transform_6(%arg0: i32) -> (i32, i32) {
    %c0_i32 = arith.constant 0 : i32
    %c0_i32_0 = arith.constant 0 : i32
    %c0_i32_1 = arith.constant 0 : i32
    return %c0_i32, %c0_i32_0 : i32, i32
  }
  func.func @transform_7(%arg0: i32) -> (i32, i32) {
    %c0_i32 = arith.constant 0 : i32
    %c0_i32_0 = arith.constant 0 : i32
    %c0_i32_1 = arith.constant 0 : i32
    return %c0_i32, %c0_i32_0 : i32, i32
  }
  func.func @transform_8(%arg0: i32) -> (i32, i32) {
    %c0_i32 = arith.constant 0 : i32
    %c0_i32_0 = arith.constant 0 : i32
    %c0_i32_1 = arith.constant 0 : i32
    return %c0_i32, %c0_i32_0 : i32, i32
  }
  func.func @transform_9(%arg0: i32) -> (i32, i32) {
    %c0_i32 = arith.constant 0 : i32
    %c0_i32_0 = arith.constant 0 : i32
    %c0_i32_1 = arith.constant 0 : i32
    return %c0_i32, %c0_i32_0 : i32, i32
  }
  func.func @transform_10(%arg0: i32) -> (i32, i32) {
    %c0_i32 = arith.constant 0 : i32
    %c0_i32_0 = arith.constant 0 : i32
    %c0_i32_1 = arith.constant 0 : i32
    return %c0_i32, %c0_i32_0 : i32, i32
  }
  func.func @transform_11(%arg0: i32) -> (i32, i32) {
    %c0_i32 = arith.constant 0 : i32
    %c0_i32_0 = arith.constant 0 : i32
    %c0_i32_1 = arith.constant 0 : i32
    return %c0_i32, %c0_i32_0 : i32, i32
  }
}

</mosaic_0001>

<llo_original>
// kernel: tpu_custom_call.1
$region0: #{tpu_custom_call.1}
  #allocation0 [shape = 'u32[]', space=smem, size = 0x4, offset = 0x4, fixed_abs, tag = 'smem constant byte address 0x4 - core index']
  #allocation1 [shape = 'u32[144,128]{1,0:T(1,128)}', space=vmem, size = 0x12000, scoped, tag = 'internal scratch']
  %s0 = inlined_call_operand.hbm [shape: bf16[16,128], index: 0, kind: input, shape index: {}]
  %s1 = inlined_call_operand.hbm [shape: f32[16,128], index: 1, kind: input, shape index: {}]
  %s2 = inlined_call_operand.hbm [shape: bf16[16,8,128], index: 2, kind: input, shape index: {}]
  %s3 = inlined_call_operand.hbm [shape: bf16[128,384], index: 3, kind: input, shape index: {}]
  %s4 = inlined_call_operand.hbm [shape: bf16[128,384], index: 4, kind: input, shape index: {}]
  %s5 = inlined_call_operand.vmem [shape: f32[1,384], index: 5, kind: input, shape index: {}]
  %s6 = inlined_call_operand.vmem [shape: f32[1,384], index: 6, kind: input, shape index: {}]
  %s7 = inlined_call_operand.hbm [shape: bf16[128,128], index: 7, kind: input, shape index: {}]
  %s8 = inlined_call_operand.hbm [shape: bf16[128,128], index: 8, kind: input, shape index: {}]
  %s9 = inlined_call_operand.vmem [shape: f32[1,128], index: 9, kind: input, shape index: {}]
  %s10 = inlined_call_operand.hbm [shape: bf16[16,128], index: 10, kind: output, shape index: {0}]
  %s11 = inlined_call_operand.hbm [shape: f32[16,128], index: 11, kind: output, shape index: {1}]
  %12 = xla_tuple %s10, %s11
  %s13 = sld [smem:[#allocation0]]
  $region86: #{tpu_custom_call.1} parent=0
    _
  %s15 = ssub.s32 1, %s13
  %s16 = scalar_select 0, %s15, %s13
  $region1: #{tpu_custom_call.1} parent=0
    #allocation2 [shape = 'u8[4096]{0}', space=vmem, size = 0x1000, scoped, tag = 'input window, operand 0, single buffered']
    #allocation3 [shape = 's32[1]{0}', space=sflag, size = 0x4, scoped, tag = 'scoped memory for tpu_custom_call.1']
    #allocation4 [shape = 's32[1]{0}', space=sflag, size = 0x4, scoped, tag = 'scoped memory for tpu_custom_call.1']
    #allocation5 [shape = 'u8[8192]{0}', space=vmem, size = 0x2000, scoped, tag = 'input window, operand 1, single buffered']
    #allocation6 [shape = 's32[1]{0}', space=sflag, size = 0x4, scoped, tag = 'scoped memory for tpu_custom_call.1']
    #allocation7 [shape = 'u8[32768]{0}', space=vmem, size = 0x8000, scoped, tag = 'input window, operand 2, single buffered']
    #allocation8 [shape = 'u8[98304]{0}', space=vmem, size = 0x18000, scoped, tag = 'input window, operand 3, single buffered']
    #allocation9 [shape = 's32[1]{0}', space=sflag, size = 0x4, scoped, tag = 'scoped memory for tpu_custom_call.1']
    #allocation10 [shape = 'u8[98304]{0}', space=vmem, size = 0x18000, scoped, tag = 'input window, operand 4, single buffered']
    #allocation11 [shape = 'u8[32768]{0}', space=vmem, size = 0x8000, scoped, tag = 'input window, operand 7, single buffered']
    #allocation12 [shape = 's32[1]{0}', space=sflag, size = 0x4, scoped, tag = 'scoped memory for tpu_custom_call.1']
    #allocation13 [shape = 'u8[32768]{0}', space=vmem, size = 0x8000, scoped, tag = 'input window, operand 8, single buffered']
    #allocation14 [shape = 'u8[4096]{0}', space=vmem, size = 0x1000, scoped, tag = 'output window, operand 0, single buffered']
    #allocation15 [shape = 'u8[8192]{0}', space=vmem, size = 0x2000, scoped, tag = 'output window, operand 1, single buffered']
    #allocation16 [shape = 's32[1]{0}', space=sflag, size = 0x4, scoped, tag = 'scoped memory for tpu_custom_call.1']
    %17 = vsyncpa [#allocation3], 0
    %18 = vsyncpa [#allocation6], 0
    %19 = vsyncpa [#allocation9], 0
    %20 = vsyncpa [#allocation12], 0
    %21 = vsyncpa [#allocation4], 0
    %22 = vsyncpa [#allocation16], 0
    // Predicated region
    $region2: #{tpu_custom_call.1} parent=1 // pred_check
      _
    $region3: #{tpu_custom_call.1} parent=1 // pred_check_branch
      %24 = sbr.rel (0) target = $region5
    $region4: #{tpu_custom_call.1} parent=1 // pred_region
      %s26 = ssub.s32 128, 128
      %27 = vsyncadd [#allocation3], %s26
      %s28 = sshll.u32 [#allocation2], 4
      %s29 = int_to_ptr.vmem [resolvable:$true] %s28
      %34 = dma.hbm_to_vmem [thread:$0]  %s0, 128, %s29, [#allocation3], 64, 64, 4
    $region5: #{tpu_custom_call.1} parent=1 // pred_fallthru
      _
    // Predicated region
    $region6: #{tpu_custom_call.1} parent=1 // pred_check
      _
    $region7: #{tpu_custom_call.1} parent=1 // pred_check_branch
      %36 = sbr.rel (0) target = $region9
    $region8: #{tpu_custom_call.1} parent=1 // pred_region
      %s38 = ssub.s32 256, 256
      %39 = vsyncadd [#allocation6], %s38
      %s40 = sshll.u32 [#allocation5], 4
      %s41 = int_to_ptr.vmem [resolvable:$true] %s40
      %46 = dma.hbm_to_vmem [thread:$0]  %s1, 256, %s41, [#allocation6], 128, 128, 8
    $region9: #{tpu_custom_call.1} parent=1 // pred_fallthru
      _
    // Predicated region
    $region10: #{tpu_custom_call.1} parent=1 // pred_check
      _
    $region11: #{tpu_custom_call.1} parent=1 // pred_check_branch
      %48 = sbr.rel (0) target = $region13
    $region12: #{tpu_custom_call.1} parent=1 // pred_region
      %s50 = ssub.s32 1024, 1024
      %51 = vsyncadd [#allocation6], %s50
      %s52 = sshll.u32 [#allocation7], 4
      %s53 = int_to_ptr.vmem [resolvable:$true] %s52
      %58 = dma.hbm_to_vmem [thread:$0]  %s2, 1024, %s53, [#allocation6], 64, 64, 4
    $region13: #{tpu_custom_call.1} parent=1 // pred_fallthru
      _
    // Predicated region
    $region14: #{tpu_custom_call.1} parent=1 // pred_check
      _
    $region15: #{tpu_custom_call.1} parent=1 // pred_check_branch
      %60 = sbr.rel (0) target = $region17
    $region16: #{tpu_custom_call.1} parent=1 // pred_region
      %s62 = ssub.s32 3072, 3072
      %63 = vsyncadd [#allocation9], %s62
      %s64 = sshll.u32 [#allocation8], 4
      %s65 = int_to_ptr.vmem [resolvable:$true] %s64
      %70 = dma.hbm_to_vmem [thread:$0]  %s3, 3072, %s65, [#allocation9], 192, 192, 12
    $region17: #{tpu_custom_call.1} parent=1 // pred_fallthru
      _
    // Predicated region
    $region18: #{tpu_custom_call.1} parent=1 // pred_check
      _
    $region19: #{tpu_custom_call.1} parent=1 // pred_check_branch
      %72 = sbr.rel (0) target = $region21
    $region20: #{tpu_custom_call.1} parent=1 // pred_region
      %s74 = ssub.s32 3072, 3072
      %75 = vsyncadd [#allocation9], %s74
      %s76 = sshll.u32 [#allocation10], 4
      %s77 = int_to_ptr.vmem [resolvable:$true] %s76
      %82 = dma.hbm_to_vmem [thread:$0]  %s4, 3072, %s77, [#allocation9], 192, 192, 12
    $region21: #{tpu_custom_call.1} parent=1 // pred_fallthru
      _
    // Predicated region
    $region22: #{tpu_custom_call.1} parent=1 // pred_check
      _
    $region23: #{tpu_custom_call.1} parent=1 // pred_check_branch
      %84 = sbr.rel (0) target = $region25
    $region24: #{tpu_custom_call.1} parent=1 // pred_region
      _
    $region25: #{tpu_custom_call.1} parent=1 // pred_fallthru
      _
    // Predicated region
    $region26: #{tpu_custom_call.1} parent=1 // pred_check
      _
    $region27: #{tpu_custom_call.1} parent=1 // pred_check_branch
      %86 = sbr.rel (0) target = $region29
    $region28: #{tpu_custom_call.1} parent=1 // pred_region
      _
    $region29: #{tpu_custom_call.1} parent=1 // pred_fallthru
      _
    // Predicated region
    $region30: #{tpu_custom_call.1} parent=1 // pred_check
      _
    $region31: #{tpu_custom_call.1} parent=1 // pred_check_branch
      %88 = sbr.rel (0) target = $region33
    $region32: #{tpu_custom_call.1} parent=1 // pred_region
      %s90 = ssub.s32 1024, 1024
      %91 = vsyncadd [#allocation12], %s90
      %s92 = sshll.u32 [#allocation11], 4
      %s93 = int_to_ptr.vmem [resolvable:$true] %s92
      %98 = dma.hbm_to_vmem [thread:$0]  %s7, 1024, %s93, [#allocation12], 64, 64, 4
    $region33: #{tpu_custom_call.1} parent=1 // pred_fallthru
      _
    // Predicated region
    $region34: #{tpu_custom_call.1} parent=1 // pred_check
      _
    $region35: #{tpu_custom_call.1} parent=1 // pred_check_branch
      %100 = sbr.rel (0) target = $region37
    $region36: #{tpu_custom_call.1} parent=1 // pred_region
      %s102 = ssub.s32 1024, 1024
      %103 = vsyncadd [#allocation12], %s102
      %s104 = sshll.u32 [#allocation13], 4
      %s105 = int_to_ptr.vmem [resolvable:$true] %s104
      %110 = dma.hbm_to_vmem [thread:$0]  %s8, 1024, %s105, [#allocation12], 64, 64, 4
    $region37: #{tpu_custom_call.1} parent=1 // pred_fallthru
      _
    // Predicated region
    $region38: #{tpu_custom_call.1} parent=1 // pred_check
      _
    $region39: #{tpu_custom_call.1} parent=1 // pred_check_branch
      %112 = sbr.rel (0) target = $region41
    $region40: #{tpu_custom_call.1} parent=1 // pred_region
      _
    $region41: #{tpu_custom_call.1} parent=1 // pred_fallthru
      _
    // Predicated region
    $region42: #{tpu_custom_call.1} parent=1 // pred_check
      _
    $region43: #{tpu_custom_call.1} parent=1 // pred_check_branch
      %114 = sbr.rel (0) target = $region45
    $region44: #{tpu_custom_call.1} parent=1 // pred_region
      %115 = dma.done [#allocation3], 128
    $region45: #{tpu_custom_call.1} parent=1 // pred_fallthru
      _
    // Predicated region
    $region46: #{tpu_custom_call.1} parent=1 // pred_check
      _
    $region47: #{tpu_custom_call.1} parent=1 // pred_check_branch
      %117 = sbr.rel (0) target = $region49
    $region48: #{tpu_custom_call.1} parent=1 // pred_region
      %118 = dma.done [#allocation6], 256
    $region49: #{tpu_custom_call.1} parent=1 // pred_fallthru
      _
    // Predicated region
    $region50: #{tpu_custom_call.1} parent=1 // pred_check
      _
    $region51: #{tpu_custom_call.1} parent=1 // pred_check_branch
      %120 = sbr.rel (0) target = $region53
    $region52: #{tpu_custom_call.1} parent=1 // pred_region
      %121 = dma.done [#allocation6], 1024
    $region53: #{tpu_custom_call.1} parent=1 // pred_fallthru
      _
    // Predicated region
    $region54: #{tpu_custom_call.1} parent=1 // pred_check
      _
    $region55: #{tpu_custom_call.1} parent=1 // pred_check_branch
      %123 = sbr.rel (0) target = $region57
    $region56: #{tpu_custom_call.1} parent=1 // pred_region
      %124 = dma.done [#allocation9], 3072
    $region57: #{tpu_custom_call.1} parent=1 // pred_fallthru
      _
    // Predicated region
    $region58: #{tpu_custom_call.1} parent=1 // pred_check
      _
    $region59: #{tpu_custom_call.1} parent=1 // pred_check_branch
      %126 = sbr.rel (0) target = $region61
    $region60: #{tpu_custom_call.1} parent=1 // pred_region
      %127 = dma.done [#allocation9], 3072
    $region61: #{tpu_custom_call.1} parent=1 // pred_fallthru
      _
    // Predicated region
    $region62: #{tpu_custom_call.1} parent=1 // pred_check
      _
    $region63: #{tpu_custom_call.1} parent=1 // pred_check_branch
      %129 = sbr.rel (0) target = $region65
    $region64: #{tpu_custom_call.1} parent=1 // pred_region
      %130 = dma.done [#allocation12], 1024
    $region65: #{tpu_custom_call.1} parent=1 // pred_fallthru
      _
    // Predicated region
    $region66: #{tpu_custom_call.1} parent=1 // pred_check
      _
    $region67: #{tpu_custom_call.1} parent=1 // pred_check_branch
      %132 = sbr.rel (0) target = $region69
    $region68: #{tpu_custom_call.1} parent=1 // pred_region
      %133 = dma.done [#allocation12], 1024
    $region69: #{tpu_custom_call.1} parent=1 // pred_fallthru
      _
    %v135 = vld [vmem:[#allocation2] sm:$0xf]
    %v136 = vld [vmem:[#allocation2 + $0x4] sm:$0xf]
    %v137 = vld [vmem:[#allocation5] sm:$0xff]
    %v138 = vld [vmem:[#allocation5 + $0x8] sm:$0xff]
    %v139 = vpack.c.bf16 %v138, %v137
    %v140 = vld [vmem:[#allocation8] sm:$0xff]
    %v141 = vld [vmem:[#allocation8 + $0x8] sm:$0xf]
    %v142 = vld [vmem:[#allocation8 + $0xc] sm:$0xff]
    %v143 = vld [vmem:[#allocation8 + $0x14] sm:$0xf]
    %v144 = vld [vmem:[#allocation8 + $0x18] sm:$0xff]
    %v145 = vld [vmem:[#allocation8 + $0x20] sm:$0xf]
    %v146 = vld [vmem:[#allocation8 + $0x24] sm:$0xff]
    %v147 = vld [vmem:[#allocation8 + $0x2c] sm:$0xf]
    %v148 = vld [vmem:[#allocation8 + $0x30] sm:$0xff]
    %v149 = vld [vmem:[#allocation8 + $0x38] sm:$0xf]
    %v150 = vld [vmem:[#allocation8 + $0x3c] sm:$0xff]
    %v151 = vld [vmem:[#allocation8 + $0x44] sm:$0xf]
    %v152 = vld [vmem:[#allocation8 + $0x48] sm:$0xff]
    %v153 = vld [vmem:[#allocation8 + $0x50] sm:$0xf]
    %v154 = vld [vmem:[#allocation8 + $0x54] sm:$0xff]
    %v155 = vld [vmem:[#allocation8 + $0x5c] sm:$0xf]
    %v156 = vld [vmem:[#allocation8 + $0x60] sm:$0xff]
    %v157 = vld [vmem:[#allocation8 + $0x68] sm:$0xf]
    %v158 = vld [vmem:[#allocation8 + $0x6c] sm:$0xff]
    %v159 = vld [vmem:[#allocation8 + $0x74] sm:$0xf]
    %v160 = vld [vmem:[#allocation8 + $0x78] sm:$0xff]
    %v161 = vld [vmem:[#allocation8 + $0x80] sm:$0xf]
    %v162 = vld [vmem:[#allocation8 + $0x84] sm:$0xff]
    %v163 = vld [vmem:[#allocation8 + $0x8c] sm:$0xf]
    %v164 = vld [vmem:[#allocation8 + $0x90] sm:$0xff]
    %v165 = vld [vmem:[#allocation8 + $0x98] sm:$0xf]
    %v166 = vld [vmem:[#allocation8 + $0x9c] sm:$0xff]
    %v167 = vld [vmem:[#allocation8 + $0xa4] sm:$0xf]
    %v168 = vld [vmem:[#allocation8 + $0xa8] sm:$0xff]
    %v169 = vld [vmem:[#allocation8 + $0xb0] sm:$0xf]
    %v170 = vld [vmem:[#allocation8 + $0xb4] sm:$0xff]
    %v171 = vld [vmem:[#allocation8 + $0xbc] sm:$0xf]
    %v172 = vld [vmem:[%s5] sm:$0x7]
    %v174 = vlaneseq
    %v175 = vshrl.u32 %v174, 7
    %v176 = vsub.s32 0, %v175
    %v177 = vrot.slane %v172, %v176
    %v178 = vlaneseq
    %v179 = vshrl.u32 %v178, 7
    %v180 = vsub.s32 1, %v179
    %v181 = vrot.slane %v172, %v180
    %v182 = vlaneseq
    %v183 = vshrl.u32 %v182, 7
    %v184 = vsub.s32 2, %v183
    %v185 = vrot.slane %v172, %v184
    %v191 = vunpack.c.l.b16 %v135
    %v192 = vunpack.c.l.b16 %v136
    %v193 = vpack.c.b16 %v192, %v191
    %v227 = vunpack.c.l.b16 %v140
    %v228 = vunpack.c.h.b16 %v140
    %v229 = vunpack.c.l.b16 %v141
    %v230 = vunpack.c.l.b16 %v142
    %v231 = vunpack.c.h.b16 %v142
    %v232 = vunpack.c.l.b16 %v143
    %v233 = vunpack.c.l.b16 %v144
    %v234 = vunpack.c.h.b16 %v144
    %v235 = vunpack.c.l.b16 %v145
    %v236 = vunpack.c.l.b16 %v146
    %v237 = vunpack.c.h.b16 %v146
    %v238 = vunpack.c.l.b16 %v147
    %v239 = vunpack.c.l.b16 %v148
    %v240 = vunpack.c.h.b16 %v148
    %v241 = vunpack.c.l.b16 %v149
    %v242 = vunpack.c.l.b16 %v150
    %v243 = vunpack.c.h.b16 %v150
    %v244 = vunpack.c.l.b16 %v151
    %v245 = vunpack.c.l.b16 %v152
    %v246 = vunpack.c.h.b16 %v152
    %v247 = vunpack.c.l.b16 %v153
    %v248 = vunpack.c.l.b16 %v154
    %v249 = vunpack.c.h.b16 %v154
    %v250 = vunpack.c.l.b16 %v155
    %v251 = vunpack.c.l.b16 %v156
    %v252 = vunpack.c.h.b16 %v156
    %v253 = vunpack.c.l.b16 %v157
    %v254 = vunpack.c.l.b16 %v158
    %v255 = vunpack.c.h.b16 %v158
    %v256 = vunpack.c.l.b16 %v159
    %v257 = vunpack.c.l.b16 %v160
    %v258 = vunpack.c.h.b16 %v160
    %v259 = vunpack.c.l.b16 %v161
    %v260 = vunpack.c.l.b16 %v162
    %v261 = vunpack.c.h.b16 %v162
    %v262 = vunpack.c.l.b16 %v163
    %v263 = vunpack.c.l.b16 %v164
    %v264 = vunpack.c.h.b16 %v164
    %v265 = vunpack.c.l.b16 %v165
    %v266 = vunpack.c.l.b16 %v166
    %v267 = vunpack.c.h.b16 %v166
    %v268 = vunpack.c.l.b16 %v167
    %v269 = vunpack.c.l.b16 %v168
    %v270 = vunpack.c.h.b16 %v168
    %v271 = vunpack.c.l.b16 %v169
    %v272 = vunpack.c.l.b16 %v170
    %v273 = vunpack.c.h.b16 %v170
    %v274 = vunpack.c.l.b16 %v171
    %v275 = vpack.c.b16 %v230, %v227
    %v276 = vpack.c.b16 %v231, %v228
    %v277 = vpack.c.b16 %v232, %v229
    %v278 = vpack.c.b16 %v236, %v233
    %v279 = vpack.c.b16 %v237, %v234
    %v280 = vpack.c.b16 %v238, %v235
    %v281 = vpack.c.b16 %v242, %v239
    %v282 = vpack.c.b16 %v243, %v240
    %v283 = vpack.c.b16 %v244, %v241
    %v284 = vpack.c.b16 %v248, %v245
    %v285 = vpack.c.b16 %v249, %v246
    %v286 = vpack.c.b16 %v250, %v247
    %v287 = vpack.c.b16 %v254, %v251
    %v288 = vpack.c.b16 %v255, %v252
    %v289 = vpack.c.b16 %v256, %v253
    %v290 = vpack.c.b16 %v260, %v257
    %v291 = vpack.c.b16 %v261, %v258
    %v292 = vpack.c.b16 %v262, %v259
    %v293 = vpack.c.b16 %v266, %v263
    %v294 = vpack.c.b16 %v267, %v264
    %v295 = vpack.c.b16 %v268, %v265
    %v296 = vpack.c.b16 %v272, %v269
    %v297 = vpack.c.b16 %v273, %v270
    %v298 = vpack.c.b16 %v274, %v271
    %323 = vmatprep.subr.bf16.mxu0 %v297
    %324 = vmatpush1.bf16.msra.mxu0 %v296
    %325 = vmatprep.subr.bf16.mxu0 %v294
    %326 = vmatpush1.bf16.msra.mxu0 %v293
    %327 = vmatprep.subr.bf16.mxu0 %v291
    %328 = vmatpush1.bf16.msra.mxu0 %v290
    %329 = vmatprep.subr.bf16.mxu0 %v288
    %330 = vmatpush1.bf16.msra.mxu0 %v287
    %331 = vmatprep.subr.bf16.mxu0 %v285
    %332 = vmatpush1.bf16.msra.mxu0 %v284
    %333 = vmatprep.subr.bf16.mxu0 %v282
    %334 = vmatpush1.bf16.msra.mxu0 %v281
    %335 = vmatprep.subr.bf16.mxu0 %v279
    %336 = vmatpush1.bf16.msra.mxu0 %v278
    %337 = vmatprep.subr.bf16.mxu0 %v276
    %338 = vmatpush1.bf16.msra.mxu0 %v275
    %339 = vmatprep.subr.bf16.mxu0 0
    %340 = vmatpush2.bf16.msra.mxu0 0
    %341 = vmatprep.subr.bf16.mxu0 0
    %342 = vmatpush2.bf16.msra.mxu0 0
    %343 = vmatprep.subr.bf16.mxu0 0
    %344 = vmatpush2.bf16.msra.mxu0 0
    %345 = vmatprep.subr.bf16.mxu0 0
    %346 = vmatpush2.bf16.msra.mxu0 0
    %347 = vmatprep.subr.bf16.mxu0 0
    %348 = vmatpush2.bf16.msra.mxu0 0
    %349 = vmatprep.subr.bf16.mxu0 0
    %350 = vmatpush2.bf16.msra.mxu0 0
    %351 = vmatprep.subr.bf16.mxu0 0
    %352 = vmatpush2.bf16.msra.mxu0 0
    %353 = vmatprep.subr.bf16.mxu0 0
    %354 = vmatpush2.bf16.msra.mxu0 0
    %355 = vmatprep.mubr.bf16.mxu0 0
    %356 = vmatmul.mubr.bf16.gmra.mxu0 %v193
    %v357 = vpop.f32.mrf.mxu0
    %v358 = vadd.f32 %v177, %v357
    %v359 = vpop.f32.mrf.mxu0
    %v360 = vadd.f32 %v181, %v359
    %v361 = vpop.f32.mrf.mxu0
    %v362 = vadd.f32 %v177, %v361
    %v363 = vpop.f32.mrf.mxu0
    %v364 = vadd.f32 %v181, %v363
    %365 = vdwg.mxu0
    %366 = vmatprep.subr.bf16.mxu0 0
    %367 = vmatpush1.bf16.msra.mxu0 %v298
    %368 = vmatprep.subr.bf16.mxu0 0
    %369 = vmatpush1.bf16.msra.mxu0 %v295
    %370 = vmatprep.subr.bf16.mxu0 0
    %371 = vmatpush1.bf16.msra.mxu0 %v292
    %372 = vmatprep.subr.bf16.mxu0 0
    %373 = vmatpush1.bf16.msra.mxu0 %v289
    %374 = vmatprep.subr.bf16.mxu0 0
    %375 = vmatpush1.bf16.msra.mxu0 %v286
    %376 = vmatprep.subr.bf16.mxu0 0
    %377 = vmatpush1.bf16.msra.mxu0 %v283
    %378 = vmatprep.subr.bf16.mxu0 0
    %379 = vmatpush1.bf16.msra.mxu0 %v280
    %380 = vmatprep.subr.bf16.mxu0 0
    %381 = vmatpush1.bf16.msra.mxu0 %v277
    %382 = vmatprep.subr.bf16.mxu0 0
    %383 = vmatpush2.bf16.msra.mxu0 0
    %384 = vmatprep.subr.bf16.mxu0 0
    %385 = vmatpush2.bf16.msra.mxu0 0
    %386 = vmatprep.subr.bf16.mxu0 0
    %387 = vmatpush2.bf16.msra.mxu0 0
    %388 = vmatprep.subr.bf16.mxu0 0
    %389 = vmatpush2.bf16.msra.mxu0 0
    %390 = vmatprep.subr.bf16.mxu0 0
    %391 = vmatpush2.bf16.msra.mxu0 0
    %392 = vmatprep.subr.bf16.mxu0 0
    %393 = vmatpush2.bf16.msra.mxu0 0
    %394 = vmatprep.subr.bf16.mxu0 0
    %395 = vmatpush2.bf16.msra.mxu0 0
    %396 = vmatprep.subr.bf16.mxu0 0
    %397 = vmatpush2.bf16.msra.mxu0 0
    %398 = vmatprep.mubr.bf16.mxu0 0
    %399 = vmatmul.mubr.bf16.gmra.mxu0 %v193
    %v400 = vpop.f32.mrf.mxu0
    %v401 = vadd.f32 %v185, %v400
    %v402 = vpop.f32.mrf.mxu0
    %v403 = vpop.f32.mrf.mxu0
    %v404 = vadd.f32 %v185, %v403
    %v405 = vpop.f32.mrf.mxu0
    %406 = vdwg.mxu0
    %v407 = vld [vmem:[#allocation10] sm:$0xff]
    %v408 = vld [vmem:[#allocation10 + $0x8] sm:$0xf]
    %v409 = vld [vmem:[#allocation10 + $0xc] sm:$0xff]
    %v410 = vld [vmem:[#allocation10 + $0x14] sm:$0xf]
    %v411 = vld [vmem:[#allocation10 + $0x18] sm:$0xff]
    %v412 = vld [vmem:[#allocation10 + $0x20] sm:$0xf]
    %v413 = vld [vmem:[#allocation10 + $0x24] sm:$0xff]
    %v414 = vld [vmem:[#allocation10 + $0x2c] sm:$0xf]
    %v415 = vld [vmem:[#allocation10 + $0x30] sm:$0xff]
    %v416 = vld [vmem:[#allocation10 + $0x38] sm:$0xf]
    %v417 = vld [vmem:[#allocation10 + $0x3c] sm:$0xff]
    %v418 = vld [vmem:[#allocation10 + $0x44] sm:$0xf]
    %v419 = vld [vmem:[#allocation10 + $0x48] sm:$0xff]
    %v420 = vld [vmem:[#allocation10 + $0x50] sm:$0xf]
    %v421 = vld [vmem:[#allocation10 + $0x54] sm:$0xff]
    %v422 = vld [vmem:[#allocation10 + $0x5c] sm:$0xf]
    %v423 = vld [vmem:[#allocation10 + $0x60] sm:$0xff]
    %v424 = vld [vmem:[#allocation10 + $0x68] sm:$0xf]
    %v425 = vld [vmem:[#allocation10 + $0x6c] sm:$0xff]
    %v426 = vld [vmem:[#allocation10 + $0x74] sm:$0xf]
    %v427 = vld [vmem:[#allocation10 + $0x78] sm:$0xff]
    %v428 = vld [vmem:[#allocation10 + $0x80] sm:$0xf]
    %v429 = vld [vmem:[#allocation10 + $0x84] sm:$0xff]
    %v430 = vld [vmem:[#allocation10 + $0x8c] sm:$0xf]
    %v431 = vld [vmem:[#allocation10 + $0x90] sm:$0xff]
    %v432 = vld [vmem:[#allocation10 + $0x98] sm:$0xf]
    %v433 = vld [vmem:[#allocation10 + $0x9c] sm:$0xff]
    %v434 = vld [vmem:[#allocation10 + $0xa4] sm:$0xf]
    %v435 = vld [vmem:[#allocation10 + $0xa8] sm:$0xff]
    %v436 = vld [vmem:[#allocation10 + $0xb0] sm:$0xf]
    %v437 = vld [vmem:[#allocation10 + $0xb4] sm:$0xff]
    %v438 = vld [vmem:[#allocation10 + $0xbc] sm:$0xf]
    %v439 = vld [vmem:[%s6] sm:$0x7]
    %v441 = vlaneseq
    %v442 = vshrl.u32 %v441, 7
    %v443 = vsub.s32 0, %v442
    %v444 = vrot.slane %v439, %v443
    %v445 = vlaneseq
    %v446 = vshrl.u32 %v445, 7
    %v447 = vsub.s32 1, %v446
    %v448 = vrot.slane %v439, %v447
    %v449 = vlaneseq
    %v450 = vshrl.u32 %v449, 7
    %v451 = vsub.s32 2, %v450
    %v452 = vrot.slane %v439, %v451
    %v488 = vunpack.c.l.b16 %v407
    %v489 = vunpack.c.h.b16 %v407
    %v490 = vunpack.c.l.b16 %v408
    %v491 = vunpack.c.l.b16 %v409
    %v492 = vunpack.c.h.b16 %v409
    %v493 = vunpack.c.l.b16 %v410
    %v494 = vunpack.c.l.b16 %v411
    %v495 = vunpack.c.h.b16 %v411
    %v496 = vunpack.c.l.b16 %v412
    %v497 = vunpack.c.l.b16 %v413
    %v498 = vunpack.c.h.b16 %v413
    %v499 = vunpack.c.l.b16 %v414
    %v500 = vunpack.c.l.b16 %v415
    %v501 = vunpack.c.h.b16 %v415
    %v502 = vunpack.c.l.b16 %v416
    %v503 = vunpack.c.l.b16 %v417
    %v504 = vunpack.c.h.b16 %v417
    %v505 = vunpack.c.l.b16 %v418
    %v506 = vunpack.c.l.b16 %v419
    %v507 = vunpack.c.h.b16 %v419
    %v508 = vunpack.c.l.b16 %v420
    %v509 = vunpack.c.l.b16 %v421
    %v510 = vunpack.c.h.b16 %v421
    %v511 = vunpack.c.l.b16 %v422
    %v512 = vunpack.c.l.b16 %v423
    %v513 = vunpack.c.h.b16 %v423
    %v514 = vunpack.c.l.b16 %v424
    %v515 = vunpack.c.l.b16 %v425
    %v516 = vunpack.c.h.b16 %v425
    %v517 = vunpack.c.l.b16 %v426
    %v518 = vunpack.c.l.b16 %v427
    %v519 = vunpack.c.h.b16 %v427
    %v520 = vunpack.c.l.b16 %v428
    %v521 = vunpack.c.l.b16 %v429
    %v522 = vunpack.c.h.b16 %v429
    %v523 = vunpack.c.l.b16 %v430
    %v524 = vunpack.c.l.b16 %v431
    %v525 = vunpack.c.h.b16 %v431
    %v526 = vunpack.c.l.b16 %v432
    %v527 = vunpack.c.l.b16 %v433
    %v528 = vunpack.c.h.b16 %v433
    %v529 = vunpack.c.l.b16 %v434
    %v530 = vunpack.c.l.b16 %v435
    %v531 = vunpack.c.h.b16 %v435
    %v532 = vunpack.c.l.b16 %v436
    %v533 = vunpack.c.l.b16 %v437
    %v534 = vunpack.c.h.b16 %v437
    %v535 = vunpack.c.l.b16 %v438
    %v536 = vpack.c.b16 %v491, %v488
    %v537 = vpack.c.b16 %v492, %v489
    %v538 = vpack.c.b16 %v493, %v490
    %v539 = vpack.c.b16 %v497, %v494
    %v540 = vpack.c.b16 %v498, %v495
    %v541 = vpack.c.b16 %v499, %v496
    %v542 = vpack.c.b16 %v503, %v500
    %v543 = vpack.c.b16 %v504, %v501
    %v544 = vpack.c.b16 %v505, %v502
    %v545 = vpack.c.b16 %v509, %v506
    %v546 = vpack.c.b16 %v510, %v507
    %v547 = vpack.c.b16 %v511, %v508
    %v548 = vpack.c.b16 %v515, %v512
    %v549 = vpack.c.b16 %v516, %v513
    %v550 = vpack.c.b16 %v517, %v514
    %v551 = vpack.c.b16 %v521, %v518
    %v552 = vpack.c.b16 %v522, %v519
    %v553 = vpack.c.b16 %v523, %v520
    %v554 = vpack.c.b16 %v527, %v524
    %v555 = vpack.c.b16 %v528, %v525
    %v556 = vpack.c.b16 %v529, %v526
    %v557 = vpack.c.b16 %v533, %v530
    %v558 = vpack.c.b16 %v534, %v531
    %v559 = vpack.c.b16 %v535, %v532
    %584 = vmatprep.subr.bf16.mxu0 %v558
    %585 = vmatpush1.bf16.msra.mxu0 %v557
    %586 = vmatprep.subr.bf16.mxu0 %v555
    %587 = vmatpush1.bf16.msra.mxu0 %v554
    %588 = vmatprep.subr.bf16.mxu0 %v552
    %589 = vmatpush1.bf16.msra.mxu0 %v551
    %590 = vmatprep.subr.bf16.mxu0 %v549
    %591 = vmatpush1.bf16.msra.mxu0 %v548
    %592 = vmatprep.subr.bf16.mxu0 %v546
    %593 = vmatpush1.bf16.msra.mxu0 %v545
    %594 = vmatprep.subr.bf16.mxu0 %v543
    %595 = vmatpush1.bf16.msra.mxu0 %v542
    %596 = vmatprep.subr.bf16.mxu0 %v540
    %597 = vmatpush1.bf16.msra.mxu0 %v539
    %598 = vmatprep.subr.bf16.mxu0 %v537
    %599 = vmatpush1.bf16.msra.mxu0 %v536
    %600 = vmatprep.subr.bf16.mxu0 0
    %601 = vmatpush2.bf16.msra.mxu0 0
    %602 = vmatprep.subr.bf16.mxu0 0
    %603 = vmatpush2.bf16.msra.mxu0 0
    %604 = vmatprep.subr.bf16.mxu0 0
    %605 = vmatpush2.bf16.msra.mxu0 0
    %606 = vmatprep.subr.bf16.mxu0 0
    %607 = vmatpush2.bf16.msra.mxu0 0
    %608 = vmatprep.subr.bf16.mxu0 0
    %609 = vmatpush2.bf16.msra.mxu0 0
    %610 = vmatprep.subr.bf16.mxu0 0
    %611 = vmatpush2.bf16.msra.mxu0 0
    %612 = vmatprep.subr.bf16.mxu0 0
    %613 = vmatpush2.bf16.msra.mxu0 0
    %614 = vmatprep.subr.bf16.mxu0 0
    %615 = vmatpush2.bf16.msra.mxu0 0
    %616 = vmatprep.mubr.bf16.mxu0 0
    %617 = vmatmul.mubr.bf16.gmra.mxu0 %v139
    %v618 = vpop.f32.mrf.mxu0
    %v619 = vadd.f32 %v444, %v618
    %v620 = vpop.f32.mrf.mxu0
    %v621 = vadd.f32 %v448, %v620
    %v622 = vpop.f32.mrf.mxu0
    %v623 = vadd.f32 %v444, %v622
    %v624 = vpop.f32.mrf.mxu0
    %v625 = vadd.f32 %v448, %v624
    %626 = vdwg.mxu0
    %627 = vmatprep.subr.bf16.mxu0 0
    %628 = vmatpush1.bf16.msra.mxu0 %v559
    %629 = vmatprep.subr.bf16.mxu0 0
    %630 = vmatpush1.bf16.msra.mxu0 %v556
    %631 = vmatprep.subr.bf16.mxu0 0
    %632 = vmatpush1.bf16.msra.mxu0 %v553
    %633 = vmatprep.subr.bf16.mxu0 0
    %634 = vmatpush1.bf16.msra.mxu0 %v550
    %635 = vmatprep.subr.bf16.mxu0 0
    %636 = vmatpush1.bf16.msra.mxu0 %v547
    %637 = vmatprep.subr.bf16.mxu0 0
    %638 = vmatpush1.bf16.msra.mxu0 %v544
    %639 = vmatprep.subr.bf16.mxu0 0
    %640 = vmatpush1.bf16.msra.mxu0 %v541
    %641 = vmatprep.subr.bf16.mxu0 0
    %642 = vmatpush1.bf16.msra.mxu0 %v538
    %643 = vmatprep.subr.bf16.mxu0 0
    %644 = vmatpush2.bf16.msra.mxu0 0
    %645 = vmatprep.subr.bf16.mxu0 0
    %646 = vmatpush2.bf16.msra.mxu0 0
    %647 = vmatprep.subr.bf16.mxu0 0
    %648 = vmatpush2.bf16.msra.mxu0 0
    %649 = vmatprep.subr.bf16.mxu0 0
    %650 = vmatpush2.bf16.msra.mxu0 0
    %651 = vmatprep.subr.bf16.mxu0 0
    %652 = vmatpush2.bf16.msra.mxu0 0
    %653 = vmatprep.subr.bf16.mxu0 0
    %654 = vmatpush2.bf16.msra.mxu0 0
    %655 = vmatprep.subr.bf16.mxu0 0
    %656 = vmatpush2.bf16.msra.mxu0 0
    %657 = vmatprep.subr.bf16.mxu0 0
    %658 = vmatpush2.bf16.msra.mxu0 0
    %659 = vmatprep.mubr.bf16.mxu0 0
    %660 = vmatmul.mubr.bf16.gmra.mxu0 %v139
    %v661 = vpop.f32.mrf.mxu0
    %v662 = vadd.f32 %v452, %v661
    %v663 = vpop.f32.mrf.mxu0
    %v664 = vpop.f32.mrf.mxu0
    %v665 = vadd.f32 %v452, %v664
    %v666 = vpop.f32.mrf.mxu0
    %667 = vdwg.mxu0
    %v668 = vadd.f32 %v358, %v619
    %v669 = vadd.f32 %v362, %v623
    %v670 = vxor.u32 %v668, 2147483648
    %v671 = vxor.u32 %v669, 2147483648
    %v672 = vmul.f32 %v670, 1.442695
    %v673 = vpow.pop %v672
    %v674 = vmul.f32 %v671, 1.442695
    %v675 = vpow.pop %v674
    %v676 = vadd.f32 %v673, 1.0
    %v677 = vadd.f32 %v675, 1.0
    %v678 = vrcp.pop %v676
    %v679 = vmul.f32 1.0, %v678
    %v680 = vrcp.pop %v677
    %v681 = vmul.f32 1.0, %v680
    %v682 = vadd.f32 %v360, %v621
    %v683 = vadd.f32 %v364, %v625
    %v684 = vxor.u32 %v682, 2147483648
    %v685 = vxor.u32 %v683, 2147483648
    %v686 = vmul.f32 %v684, 1.442695
    %v687 = vpow.pop %v686
    %v688 = vmul.f32 %v685, 1.442695
    %v689 = vpow.pop %v688
    %v690 = vadd.f32 %v687, 1.0
    %v691 = vadd.f32 %v689, 1.0
    %v692 = vrcp.pop %v690
    %v693 = vmul.f32 1.0, %v692
    %v694 = vrcp.pop %v691
    %v695 = vmul.f32 1.0, %v694
    %v696 = vmul.f32 %v679, %v662
    %v697 = vmul.f32 %v681, %v665
    %v698 = vadd.f32 %v401, %v696
    %v699 = vadd.f32 %v404, %v697
    %v700 = vtanh.pop %v698
    %v701 = vtanh.pop %v699
    %v702 = vsub.f32 1.0, %v693
    %v703 = vsub.f32 1.0, %v695
    %v704 = vmul.f32 %v702, %v700
    %v705 = vmul.f32 %v703, %v701
    %v706 = vmul.f32 %v693, %v137
    %v707 = vmul.f32 %v695, %v138
    %v708 = vadd.f32 %v704, %v706
    %v709 = vadd.f32 %v705, %v707
    %710 = vst [vmem:[#allocation15] sm:$0xff] %v708
    %711 = vst [vmem:[#allocation15 + $0x8] sm:$0xff] %v709
    %v712 = vld [vmem:[#allocation7] sm:$0xf]
    %v713 = vld [vmem:[#allocation7 + $0x4] sm:$0xf]
    %v714 = vld [vmem:[#allocation7 + $0x8] sm:$0xf]
    %v715 = vld [vmem:[#allocation7 + $0xc] sm:$0xf]
    %v716 = vld [vmem:[#allocation7 + $0x10] sm:$0xf]
    %v717 = vld [vmem:[#allocation7 + $0x14] sm:$0xf]
    %v718 = vld [vmem:[#allocation7 + $0x18] sm:$0xf]
    %v719 = vld [vmem:[#allocation7 + $0x1c] sm:$0xf]
    %v720 = vld [vmem:[#allocation7 + $0x20] sm:$0xf]
    %v721 = vld [vmem:[#allocation7 + $0x24] sm:$0xf]
    %v722 = vld [vmem:[#allocation7 + $0x28] sm:$0xf]
    %v723 = vld [vmem:[#allocation7 + $0x2c] sm:$0xf]
    %v724 = vld [vmem:[#allocation7 + $0x30] sm:$0xf]
    %v725 = vld [vmem:[#allocation7 + $0x34] sm:$0xf]
    %v726 = vld [vmem:[#allocation7 + $0x38] sm:$0xf]
    %v727 = vld [vmem:[#allocation7 + $0x3c] sm:$0xf]
    %v730 = vcombine.high %v708, %v708
    %v732 = vunpack.c.l.s4 1966171168
    %v733 = vunpack.c.0.s8 %v732
    %v734 = vlaneseq
    %v735 = vshrl.u32 %v734, 7
    %v736 = vsub.s32 %v733, %v735
    %v737 = vrot.slane %v708, %v736
    %v739 = vunpack.c.l.s4 1966171168
    %v740 = vunpack.c.0.s8 %v739
    %v741 = vlaneseq
    %v742 = vshrl.u32 %v741, 7
    %v743 = vsub.s32 %v740, %v742
    %v744 = vrot.slane %v730, %v743
    %v745 = vcombine.high %v737, %v737
    %v746 = vcombine.high %v744, %v744
    %v748 = vunpack.c.l.s4 1966171168
    %v749 = vunpack.c.0.s8 %v748
    %v750 = vlaneseq
    %v751 = vshrl.u32 %v750, 7
    %v752 = vsub.s32 %v749, %v751
    %v753 = vrot.slane %v737, %v752
    %v755 = vunpack.c.l.s4 1966171168
    %v756 = vunpack.c.0.s8 %v755
    %v757 = vlaneseq
    %v758 = vshrl.u32 %v757, 7
    %v759 = vsub.s32 %v756, %v758
    %v760 = vrot.slane %v744, %v759
    %v762 = vunpack.c.l.s4 1966171168
    %v763 = vunpack.c.0.s8 %v762
    %v764 = vlaneseq
    %v765 = vshrl.u32 %v764, 7
    %v766 = vsub.s32 %v763, %v765
    %v767 = vrot.slane %v745, %v766
    %v769 = vunpack.c.l.s4 1966171168
    %v770 = vunpack.c.0.s8 %v769
    %v771 = vlaneseq
    %v772 = vshrl.u32 %v771, 7
    %v773 = vsub.s32 %v770, %v772
    %v774 = vrot.slane %v746, %v773
    %v775 = vcombine.high %v753, %v753
    %v776 = vcombine.high %v760, %v760
    %v777 = vcombine.high %v767, %v767
    %v778 = vcombine.high %v774, %v774
    %v779 = vcombine.high %v709, %v709
    %v781 = vunpack.c.l.s4 1966171168
    %v782 = vunpack.c.0.s8 %v781
    %v783 = vlaneseq
    %v784 = vshrl.u32 %v783, 7
    %v785 = vsub.s32 %v782, %v784
    %v786 = vrot.slane %v709, %v785
    %v788 = vunpack.c.l.s4 1966171168
    %v789 = vunpack.c.0.s8 %v788
    %v790 = vlaneseq
    %v791 = vshrl.u32 %v790, 7
    %v792 = vsub.s32 %v789, %v791
    %v793 = vrot.slane %v779, %v792
    %v794 = vcombine.high %v786, %v786
    %v795 = vcombine.high %v793, %v793
    %v797 = vunpack.c.l.s4 1966171168
    %v798 = vunpack.c.0.s8 %v797
    %v799 = vlaneseq
    %v800 = vshrl.u32 %v799, 7
    %v801 = vsub.s32 %v798, %v800
    %v802 = vrot.slane %v786, %v801
    %v804 = vunpack.c.l.s4 1966171168
    %v805 = vunpack.c.0.s8 %v804
    %v806 = vlaneseq
    %v807 = vshrl.u32 %v806, 7
    %v808 = vsub.s32 %v805, %v807
    %v809 = vrot.slane %v793, %v808
    %v811 = vunpack.c.l.s4 1966171168
    %v812 = vunpack.c.0.s8 %v811
    %v813 = vlaneseq
    %v814 = vshrl.u32 %v813, 7
    %v815 = vsub.s32 %v812, %v814
    %v816 = vrot.slane %v794, %v815
    %v818 = vunpack.c.l.s4 1966171168
    %v819 = vunpack.c.0.s8 %v818
    %v820 = vlaneseq
    %v821 = vshrl.u32 %v820, 7
    %v822 = vsub.s32 %v819, %v821
    %v823 = vrot.slane %v795, %v822
    %v824 = vcombine.high %v802, %v802
    %v825 = vcombine.high %v809, %v809
    %v826 = vcombine.high %v816, %v816
    %v827 = vcombine.high %v823, %v823
    %v828 = vunpack.c.l.bf16 %v712
    %v829 = vunpack.c.l.bf16 %v713
    %v830 = vunpack.c.l.bf16 %v714
    %v831 = vunpack.c.l.bf16 %v715
    %v832 = vunpack.c.l.bf16 %v716
    %v833 = vunpack.c.l.bf16 %v717
    %v834 = vunpack.c.l.bf16 %v718
    %v835 = vunpack.c.l.bf16 %v719
    %v836 = vunpack.c.l.bf16 %v720
    %v837 = vunpack.c.l.bf16 %v721
    %v838 = vunpack.c.l.bf16 %v722
    %v839 = vunpack.c.l.bf16 %v723
    %v840 = vunpack.c.l.bf16 %v724
    %v841 = vunpack.c.l.bf16 %v725
    %v842 = vunpack.c.l.bf16 %v726
    %v843 = vunpack.c.l.bf16 %v727
    %v844 = vlaneseq
    %v845 = vshrl.u32 %v844, 7
    %v846 = vsub.s32 0, %v845
    %v847 = vrot.slane %v753, %v846
    %v848 = vlaneseq
    %v849 = vshrl.u32 %v848, 7
    %v850 = vsub.s32 0, %v849
    %v851 = vrot.slane %v767, %v850
    %v852 = vlaneseq
    %v853 = vshrl.u32 %v852, 7
    %v854 = vsub.s32 0, %v853
    %v855 = vrot.slane %v775, %v854
    %v856 = vlaneseq
    %v857 = vshrl.u32 %v856, 7
    %v858 = vsub.s32 0, %v857
    %v859 = vrot.slane %v777, %v858
    %v860 = vlaneseq
    %v861 = vshrl.u32 %v860, 7
    %v862 = vsub.s32 0, %v861
    %v863 = vrot.slane %v760, %v862
    %v864 = vlaneseq
    %v865 = vshrl.u32 %v864, 7
    %v866 = vsub.s32 0, %v865
    %v867 = vrot.slane %v774, %v866
    %v868 = vlaneseq
    %v869 = vshrl.u32 %v868, 7
    %v870 = vsub.s32 0, %v869
    %v871 = vrot.slane %v776, %v870
    %v872 = vlaneseq
    %v873 = vshrl.u32 %v872, 7
    %v874 = vsub.s32 0, %v873
    %v875 = vrot.slane %v778, %v874
    %v876 = vlaneseq
    %v877 = vshrl.u32 %v876, 7
    %v878 = vsub.s32 0, %v877
    %v879 = vrot.slane %v802, %v878
    %v880 = vlaneseq
    %v881 = vshrl.u32 %v880, 7
    %v882 = vsub.s32 0, %v881
    %v883 = vrot.slane %v816, %v882
    %v884 = vlaneseq
    %v885 = vshrl.u32 %v884, 7
    %v886 = vsub.s32 0, %v885
    %v887 = vrot.slane %v824, %v886
    %v888 = vlaneseq
    %v889 = vshrl.u32 %v888, 7
    %v890 = vsub.s32 0, %v889
    %v891 = vrot.slane %v826, %v890
    %v892 = vlaneseq
    %v893 = vshrl.u32 %v892, 7
    %v894 = vsub.s32 0, %v893
    %v895 = vrot.slane %v809, %v894
    %v896 = vlaneseq
    %v897 = vshrl.u32 %v896, 7
    %v898 = vsub.s32 0, %v897
    %v899 = vrot.slane %v823, %v898
    %v900 = vlaneseq
    %v901 = vshrl.u32 %v900, 7
    %v902 = vsub.s32 0, %v901
    %v903 = vrot.slane %v825, %v902
    %v904 = vlaneseq
    %v905 = vshrl.u32 %v904, 7
    %v906 = vsub.s32 0, %v905
    %v907 = vrot.slane %v827, %v906
    %v924 = vmul.f32 %v828, %v847
    %v925 = vmul.f32 %v829, %v851
    %v926 = vmul.f32 %v830, %v855
    %v927 = vmul.f32 %v831, %v859
    %v928 = vmul.f32 %v832, %v863
    %v929 = vmul.f32 %v833, %v867
    %v930 = vmul.f32 %v834, %v871
    %v931 = vmul.f32 %v835, %v875
    %v932 = vmul.f32 %v836, %v879
    %v933 = vmul.f32 %v837, %v883
    %v934 = vmul.f32 %v838, %v887
    %v935 = vmul.f32 %v839, %v891
    %v936 = vmul.f32 %v840, %v895
    %v937 = vmul.f32 %v841, %v899
    %v938 = vmul.f32 %v842, %v903
    %v939 = vmul.f32 %v843, %v907
    %940 = vadd.xlane.f32.xlu0 %v924
    %v941 = vpop.xlane.xlu0 %940
    %942 = vadd.xlane.f32.xlu0 %v925
    %v943 = vpop.xlane.xlu0 %942
    %944 = vadd.xlane.f32.xlu0 %v926
    %v945 = vpop.xlane.xlu0 %944
    %946 = vadd.xlane.f32.xlu0 %v927
    %v947 = vpop.xlane.xlu0 %946
    %948 = vadd.xlane.f32.xlu0 %v928
    %v949 = vpop.xlane.xlu0 %948
    %950 = vadd.xlane.f32.xlu0 %v929
    %v951 = vpop.xlane.xlu0 %950
    %952 = vadd.xlane.f32.xlu0 %v930
    %v953 = vpop.xlane.xlu0 %952
    %954 = vadd.xlane.f32.xlu0 %v931
    %v955 = vpop.xlane.xlu0 %954
    %956 = vadd.xlane.f32.xlu0 %v932
    %v957 = vpop.xlane.xlu0 %956
    %958 = vadd.xlane.f32.xlu0 %v933
    %v959 = vpop.xlane.xlu0 %958
    %960 = vadd.xlane.f32.xlu0 %v934
    %v961 = vpop.xlane.xlu0 %960
    %962 = vadd.xlane.f32.xlu0 %v935
    %v963 = vpop.xlane.xlu0 %962
    %964 = vadd.xlane.f32.xlu0 %v936
    %v965 = vpop.xlane.xlu0 %964
    %966 = vadd.xlane.f32.xlu0 %v937
    %v967 = vpop.xlane.xlu0 %966
    %968 = vadd.xlane.f32.xlu0 %v938
    %v969 = vpop.xlane.xlu0 %968
    %970 = vadd.xlane.f32.xlu0 %v939
    %v971 = vpop.xlane.xlu0 %970
    %v988 = vlaneseq
    %v989 = vand.u32 %v988, 127
    %v990 = vlaneseq
    %v991 = vshrl.u32 %v990, 7
    %v992 = vsub.s32 %v989, %v991
    %v993 = vrot.slane %v941, %v992
    %v994 = vlaneseq
    %v995 = vshrl.u32 %v994, 7
    %v996 = vsub.s32 %v989, %v995
    %v997 = vrot.slane %v943, %v996
    %v998 = vlaneseq
    %v999 = vshrl.u32 %v998, 7
    %v1000 = vsub.s32 %v989, %v999
    %v1001 = vrot.slane %v945, %v1000
    %v1002 = vlaneseq
    %v1003 = vshrl.u32 %v1002, 7
    %v1004 = vsub.s32 %v989, %v1003
    %v1005 = vrot.slane %v947, %v1004
    %v1006 = vlaneseq
    %v1007 = vshrl.u32 %v1006, 7
    %v1008 = vsub.s32 %v989, %v1007
    %v1009 = vrot.slane %v949, %v1008
    %v1010 = vlaneseq
    %v1011 = vshrl.u32 %v1010, 7
    %v1012 = vsub.s32 %v989, %v1011
    %v1013 = vrot.slane %v951, %v1012
    %v1014 = vlaneseq
    %v1015 = vshrl.u32 %v1014, 7
    %v1016 = vsub.s32 %v989, %v1015
    %v1017 = vrot.slane %v953, %v1016
    %v1018 = vlaneseq
    %v1019 = vshrl.u32 %v1018, 7
    %v1020 = vsub.s32 %v989, %v1019
    %v1021 = vrot.slane %v955, %v1020
    %v1022 = vlaneseq
    %v1023 = vshrl.u32 %v1022, 7
    %v1024 = vsub.s32 %v989, %v1023
    %v1025 = vrot.slane %v957, %v1024
    %v1026 = vlaneseq
    %v1027 = vshrl.u32 %v1026, 7
    %v1028 = vsub.s32 %v989, %v1027
    %v1029 = vrot.slane %v959, %v1028
    %v1030 = vlaneseq
    %v1031 = vshrl.u32 %v1030, 7
    %v1032 = vsub.s32 %v989, %v1031
    %v1033 = vrot.slane %v961, %v1032
    %v1034 = vlaneseq
    %v1035 = vshrl.u32 %v1034, 7
    %v1036 = vsub.s32 %v989, %v1035
    %v1037 = vrot.slane %v963, %v1036
    %v1038 = vlaneseq
    %v1039 = vshrl.u32 %v1038, 7
    %v1040 = vsub.s32 %v989, %v1039
    %v1041 = vrot.slane %v965, %v1040
    %v1042 = vlaneseq
    %v1043 = vshrl.u32 %v1042, 7
    %v1044 = vsub.s32 %v989, %v1043
    %v1045 = vrot.slane %v967, %v1044
    %v1046 = vlaneseq
    %v1047 = vshrl.u32 %v1046, 7
    %v1048 = vsub.s32 %v989, %v1047
    %v1049 = vrot.slane %v969, %v1048
    %v1050 = vlaneseq
    %v1051 = vshrl.u32 %v1050, 7
    %v1052 = vsub.s32 %v989, %v1051
    %v1053 = vrot.slane %v971, %v1052
    %vm1054 = vcmask 1041409
    %v1055 = vsel %vm1054, %v997, %v993
    %vm1056 = vcmask 1042434
    %v1057 = vsel %vm1056, %v1001, %v1055
    %vm1058 = vcmask 1043459
    %v1059 = vsel %vm1058, %v1005, %v1057
    %vm1060 = vcmask 1044484
    %v1061 = vsel %vm1060, %v1009, %v1059
    %vm1062 = vcmask 1045509
    %v1063 = vsel %vm1062, %v1013, %v1061
    %vm1064 = vcmask 1046534
    %v1065 = vsel %vm1064, %v1017, %v1063
    %vm1066 = vcmask 1047559
    %v1067 = vsel %vm1066, %v1021, %v1065
    %v1068 = vsel %vm1054, %v1029, %v1025
    %v1069 = vsel %vm1056, %v1033, %v1068
    %v1070 = vsel %vm1058, %v1037, %v1069
    %v1071 = vsel %vm1060, %v1041, %v1070
    %v1072 = vsel %vm1062, %v1045, %v1071
    %v1073 = vsel %vm1064, %v1049, %v1072
    %v1074 = vsel %vm1066, %v1053, %v1073
    %vm1077 = vcmask 64512
    %v1078 = vsel %vm1077, %v1067, -inf
    %1079 = vmax.xlane.f32.xlu0 %v1078
    %v1080 = vpop.xlane.xlu0 %1079
    %v1081 = vsel %vm1077, %v1074, -inf
    %1082 = vmax.xlane.f32.xlu0 %v1081
    %v1083 = vpop.xlane.xlu0 %1082
    %v1086 = vlaneseq
    %v1087 = vshrl.u32 %v1086, 7
    %v1088 = vsub.s32 0, %v1087
    %v1089 = vrot.slane %v1080, %v1088
    %v1090 = vlaneseq
    %v1091 = vshrl.u32 %v1090, 7
    %v1092 = vsub.s32 1, %v1091
    %v1093 = vrot.slane %v1080, %v1092
    %v1094 = vlaneseq
    %v1095 = vshrl.u32 %v1094, 7
    %v1096 = vsub.s32 2, %v1095
    %v1097 = vrot.slane %v1080, %v1096
    %v1098 = vlaneseq
    %v1099 = vshrl.u32 %v1098, 7
    %v1100 = vsub.s32 3, %v1099
    %v1101 = vrot.slane %v1080, %v1100
    %v1102 = vlaneseq
    %v1103 = vshrl.u32 %v1102, 7
    %v1104 = vsub.s32 4, %v1103
    %v1105 = vrot.slane %v1080, %v1104
    %v1106 = vlaneseq
    %v1107 = vshrl.u32 %v1106, 7
    %v1108 = vsub.s32 5, %v1107
    %v1109 = vrot.slane %v1080, %v1108
    %v1110 = vlaneseq
    %v1111 = vshrl.u32 %v1110, 7
    %v1112 = vsub.s32 6, %v1111
    %v1113 = vrot.slane %v1080, %v1112
    %v1114 = vlaneseq
    %v1115 = vshrl.u32 %v1114, 7
    %v1116 = vsub.s32 7, %v1115
    %v1117 = vrot.slane %v1080, %v1116
    %v1118 = vlaneseq
    %v1119 = vshrl.u32 %v1118, 7
    %v1120 = vsub.s32 0, %v1119
    %v1121 = vrot.slane %v1083, %v1120
    %v1122 = vlaneseq
    %v1123 = vshrl.u32 %v1122, 7
    %v1124 = vsub.s32 1, %v1123
    %v1125 = vrot.slane %v1083, %v1124
    %v1126 = vlaneseq
    %v1127 = vshrl.u32 %v1126, 7
    %v1128 = vsub.s32 2, %v1127
    %v1129 = vrot.slane %v1083, %v1128
    %v1130 = vlaneseq
    %v1131 = vshrl.u32 %v1130, 7
    %v1132 = vsub.s32 3, %v1131
    %v1133 = vrot.slane %v1083, %v1132
    %v1134 = vlaneseq
    %v1135 = vshrl.u32 %v1134, 7
    %v1136 = vsub.s32 4, %v1135
    %v1137 = vrot.slane %v1083, %v1136
    %v1138 = vlaneseq
    %v1139 = vshrl.u32 %v1138, 7
    %v1140 = vsub.s32 5, %v1139
    %v1141 = vrot.slane %v1083, %v1140
    %v1142 = vlaneseq
    %v1143 = vshrl.u32 %v1142, 7
    %v1144 = vsub.s32 6, %v1143
    %v1145 = vrot.slane %v1083, %v1144
    %v1146 = vlaneseq
    %v1147 = vshrl.u32 %v1146, 7
    %v1148 = vsub.s32 7, %v1147
    %v1149 = vrot.slane %v1083, %v1148
    %v1166 = vsub.f32 %v941, %v1089
    %v1167 = vsub.f32 %v943, %v1093
    %v1168 = vsub.f32 %v945, %v1097
    %v1169 = vsub.f32 %v947, %v1101
    %v1170 = vsub.f32 %v949, %v1105
    %v1171 = vsub.f32 %v951, %v1109
    %v1172 = vsub.f32 %v953, %v1113
    %v1173 = vsub.f32 %v955, %v1117
    %v1174 = vsub.f32 %v957, %v1121
    %v1175 = vsub.f32 %v959, %v1125
    %v1176 = vsub.f32 %v961, %v1129
    %v1177 = vsub.f32 %v963, %v1133
    %v1178 = vsub.f32 %v965, %v1137
    %v1179 = vsub.f32 %v967, %v1141
    %v1180 = vsub.f32 %v969, %v1145
    %v1181 = vsub.f32 %v971, %v1149
    %v1182 = vmul.f32 %v1166, 1.442695
    %v1183 = vpow.pop %v1182
    %v1184 = vmul.f32 %v1167, 1.442695
    %v1185 = vpow.pop %v1184
    %v1186 = vmul.f32 %v1168, 1.442695
    %v1187 = vpow.pop %v1186
    %v1188 = vmul.f32 %v1169, 1.442695
    %v1189 = vpow.pop %v1188
    %v1190 = vmul.f32 %v1170, 1.442695
    %v1191 = vpow.pop %v1190
    %v1192 = vmul.f32 %v1171, 1.442695
    %v1193 = vpow.pop %v1192
    %v1194 = vmul.f32 %v1172, 1.442695
    %v1195 = vpow.pop %v1194
    %v1196 = vmul.f32 %v1173, 1.442695
    %v1197 = vpow.pop %v1196
    %v1198 = vmul.f32 %v1174, 1.442695
    %v1199 = vpow.pop %v1198
    %v1200 = vmul.f32 %v1175, 1.442695
    %v1201 = vpow.pop %v1200
    %v1202 = vmul.f32 %v1176, 1.442695
    %v1203 = vpow.pop %v1202
    %v1204 = vmul.f32 %v1177, 1.442695
    %v1205 = vpow.pop %v1204
    %v1206 = vmul.f32 %v1178, 1.442695
    %v1207 = vpow.pop %v1206
    %v1208 = vmul.f32 %v1179, 1.442695
    %v1209 = vpow.pop %v1208
    %v1210 = vmul.f32 %v1180, 1.442695
    %v1211 = vpow.pop %v1210
    %v1212 = vmul.f32 %v1181, 1.442695
    %v1213 = vpow.pop %v1212
    %1230 = vset.pattern.permute.xlu0 0
    %1231 = vperm.xlu0 %1230, %v1183
    %v1232 = vpop.permute.xlu0 %1231
    %1233 = vset.pattern.permute.xlu0 0
    %1234 = vperm.xlu0 %1233, %v1185
    %v1235 = vpop.permute.xlu0 %1234
    %1236 = vset.pattern.permute.xlu0 0
    %1237 = vperm.xlu0 %1236, %v1187
    %v1238 = vpop.permute.xlu0 %1237
    %1239 = vset.pattern.permute.xlu0 0
    %1240 = vperm.xlu0 %1239, %v1189
    %v1241 = vpop.permute.xlu0 %1240
    %1242 = vset.pattern.permute.xlu0 0
    %1243 = vperm.xlu0 %1242, %v1191
    %v1244 = vpop.permute.xlu0 %1243
    %1245 = vset.pattern.permute.xlu0 0
    %1246 = vperm.xlu0 %1245, %v1193
    %v1247 = vpop.permute.xlu0 %1246
    %1248 = vset.pattern.permute.xlu0 0
    %1249 = vperm.xlu0 %1248, %v1195
    %v1250 = vpop.permute.xlu0 %1249
    %1251 = vset.pattern.permute.xlu0 0
    %1252 = vperm.xlu0 %1251, %v1197
    %v1253 = vpop.permute.xlu0 %1252
    %1254 = vset.pattern.permute.xlu0 0
    %1255 = vperm.xlu0 %1254, %v1199
    %v1256 = vpop.permute.xlu0 %1255
    %1257 = vset.pattern.permute.xlu0 0
    %1258 = vperm.xlu0 %1257, %v1201
    %v1259 = vpop.permute.xlu0 %1258
    %1260 = vset.pattern.permute.xlu0 0
    %1261 = vperm.xlu0 %1260, %v1203
    %v1262 = vpop.permute.xlu0 %1261
    %1263 = vset.pattern.permute.xlu0 0
    %1264 = vperm.xlu0 %1263, %v1205
    %v1265 = vpop.permute.xlu0 %1264
    %1266 = vset.pattern.permute.xlu0 0
    %1267 = vperm.xlu0 %1266, %v1207
    %v1268 = vpop.permute.xlu0 %1267
    %1269 = vset.pattern.permute.xlu0 0
    %1270 = vperm.xlu0 %1269, %v1209
    %v1271 = vpop.permute.xlu0 %1270
    %1272 = vset.pattern.permute.xlu0 0
    %1273 = vperm.xlu0 %1272, %v1211
    %v1274 = vpop.permute.xlu0 %1273
    %1275 = vset.pattern.permute.xlu0 0
    %1276 = vperm.xlu0 %1275, %v1213
    %v1277 = vpop.permute.xlu0 %1276
    %v1278 = vlaneseq
    %v1279 = vshrl.u32 %v1278, 7
    %v1280 = vsub.s32 %v989, %v1279
    %v1281 = vrot.slane %v1232, %v1280
    %v1282 = vlaneseq
    %v1283 = vshrl.u32 %v1282, 7
    %v1284 = vsub.s32 %v989, %v1283
    %v1285 = vrot.slane %v1235, %v1284
    %v1286 = vlaneseq
    %v1287 = vshrl.u32 %v1286, 7
    %v1288 = vsub.s32 %v989, %v1287
    %v1289 = vrot.slane %v1238, %v1288
    %v1290 = vlaneseq
    %v1291 = vshrl.u32 %v1290, 7
    %v1292 = vsub.s32 %v989, %v1291
    %v1293 = vrot.slane %v1241, %v1292
    %v1294 = vlaneseq
    %v1295 = vshrl.u32 %v1294, 7
    %v1296 = vsub.s32 %v989, %v1295
    %v1297 = vrot.slane %v1244, %v1296
    %v1298 = vlaneseq
    %v1299 = vshrl.u32 %v1298, 7
    %v1300 = vsub.s32 %v989, %v1299
    %v1301 = vrot.slane %v1247, %v1300
    %v1302 = vlaneseq
    %v1303 = vshrl.u32 %v1302, 7
    %v1304 = vsub.s32 %v989, %v1303
    %v1305 = vrot.slane %v1250, %v1304
    %v1306 = vlaneseq
    %v1307 = vshrl.u32 %v1306, 7
    %v1308 = vsub.s32 %v989, %v1307
    %v1309 = vrot.slane %v1253, %v1308
    %v1310 = vlaneseq
    %v1311 = vshrl.u32 %v1310, 7
    %v1312 = vsub.s32 %v989, %v1311
    %v1313 = vrot.slane %v1256, %v1312
    %v1314 = vlaneseq
    %v1315 = vshrl.u32 %v1314, 7
    %v1316 = vsub.s32 %v989, %v1315
    %v1317 = vrot.slane %v1259, %v1316
    %v1318 = vlaneseq
    %v1319 = vshrl.u32 %v1318, 7
    %v1320 = vsub.s32 %v989, %v1319
    %v1321 = vrot.slane %v1262, %v1320
    %v1322 = vlaneseq
    %v1323 = vshrl.u32 %v1322, 7
    %v1324 = vsub.s32 %v989, %v1323
    %v1325 = vrot.slane %v1265, %v1324
    %v1326 = vlaneseq
    %v1327 = vshrl.u32 %v1326, 7
    %v1328 = vsub.s32 %v989, %v1327
    %v1329 = vrot.slane %v1268, %v1328
    %v1330 = vlaneseq
    %v1331 = vshrl.u32 %v1330, 7
    %v1332 = vsub.s32 %v989, %v1331
    %v1333 = vrot.slane %v1271, %v1332
    %v1334 = vlaneseq
    %v1335 = vshrl.u32 %v1334, 7
    %v1336 = vsub.s32 %v989, %v1335
    %v1337 = vrot.slane %v1274, %v1336
    %v1338 = vlaneseq
    %v1339 = vshrl.u32 %v1338, 7
    %v1340 = vsub.s32 %v989, %v1339
    %v1341 = vrot.slane %v1277, %v1340
    %v1342 = vsel %vm1054, %v1285, %v1281
    %v1343 = vsel %vm1056, %v1289, %v1342
    %v1344 = vsel %vm1058, %v1293, %v1343
    %v1345 = vsel %vm1060, %v1297, %v1344
    %v1346 = vsel %vm1062, %v1301, %v1345
    %v1347 = vsel %vm1064, %v1305, %v1346
    %v1348 = vsel %vm1066, %v1309, %v1347
    %v1349 = vsel %vm1054, %v1317, %v1313
    %v1350 = vsel %vm1056, %v1321, %v1349
    %v1351 = vsel %vm1058, %v1325, %v1350
    %v1352 = vsel %vm1060, %v1329, %v1351
    %v1353 = vsel %vm1062, %v1333, %v1352
    %v1354 = vsel %vm1064, %v1337, %v1353
    %v1355 = vsel %vm1066, %v1341, %v1354
    %v1358 = vsel %vm1077, %v1348, 0.0
    %1359 = vadd.xlane.f32.xlu0 %v1358
    %v1360 = vpop.xlane.xlu0 %1359
    %v1361 = vsel %vm1077, %v1355, 0.0
    %1362 = vadd.xlane.f32.xlu0 %v1361
    %v1363 = vpop.xlane.xlu0 %1362
    %v1364 = vrcp.pop %v1360
    %v1365 = vrcp.pop %v1363
    %v1368 = vlaneseq
    %v1369 = vshrl.u32 %v1368, 7
    %v1370 = vsub.s32 0, %v1369
    %v1371 = vrot.slane %v1364, %v1370
    %v1372 = vlaneseq
    %v1373 = vshrl.u32 %v1372, 7
    %v1374 = vsub.s32 1, %v1373
    %v1375 = vrot.slane %v1364, %v1374
    %v1376 = vlaneseq
    %v1377 = vshrl.u32 %v1376, 7
    %v1378 = vsub.s32 2, %v1377
    %v1379 = vrot.slane %v1364, %v1378
    %v1380 = vlaneseq
    %v1381 = vshrl.u32 %v1380, 7
    %v1382 = vsub.s32 3, %v1381
    %v1383 = vrot.slane %v1364, %v1382
    %v1384 = vlaneseq
    %v1385 = vshrl.u32 %v1384, 7
    %v1386 = vsub.s32 4, %v1385
    %v1387 = vrot.slane %v1364, %v1386
    %v1388 = vlaneseq
    %v1389 = vshrl.u32 %v1388, 7
    %v1390 = vsub.s32 5, %v1389
    %v1391 = vrot.slane %v1364, %v1390
    %v1392 = vlaneseq
    %v1393 = vshrl.u32 %v1392, 7
    %v1394 = vsub.s32 6, %v1393
    %v1395 = vrot.slane %v1364, %v1394
    %v1396 = vlaneseq
    %v1397 = vshrl.u32 %v1396, 7
    %v1398 = vsub.s32 7, %v1397
    %v1399 = vrot.slane %v1364, %v1398
    %v1400 = vlaneseq
    %v1401 = vshrl.u32 %v1400, 7
    %v1402 = vsub.s32 0, %v1401
    %v1403 = vrot.slane %v1365, %v1402
    %v1404 = vlaneseq
    %v1405 = vshrl.u32 %v1404, 7
    %v1406 = vsub.s32 1, %v1405
    %v1407 = vrot.slane %v1365, %v1406
    %v1408 = vlaneseq
    %v1409 = vshrl.u32 %v1408, 7
    %v1410 = vsub.s32 2, %v1409
    %v1411 = vrot.slane %v1365, %v1410
    %v1412 = vlaneseq
    %v1413 = vshrl.u32 %v1412, 7
    %v1414 = vsub.s32 3, %v1413
    %v1415 = vrot.slane %v1365, %v1414
    %v1416 = vlaneseq
    %v1417 = vshrl.u32 %v1416, 7
    %v1418 = vsub.s32 4, %v1417
    %v1419 = vrot.slane %v1365, %v1418
    %v1420 = vlaneseq
    %v1421 = vshrl.u32 %v1420, 7
    %v1422 = vsub.s32 5, %v1421
    %v1423 = vrot.slane %v1365, %v1422
    %v1424 = vlaneseq
    %v1425 = vshrl.u32 %v1424, 7
    %v1426 = vsub.s32 6, %v1425
    %v1427 = vrot.slane %v1365, %v1426
    %v1428 = vlaneseq
    %v1429 = vshrl.u32 %v1428, 7
    %v1430 = vsub.s32 7, %v1429
    %v1431 = vrot.slane %v1365, %v1430
    %v1448 = vmul.f32 %v1183, %v1371
    %v1449 = vmul.f32 %v1185, %v1375
    %v1450 = vmul.f32 %v1187, %v1379
    %v1451 = vmul.f32 %v1189, %v1383
    %v1452 = vmul.f32 %v1191, %v1387
    %v1453 = vmul.f32 %v1193, %v1391
    %v1454 = vmul.f32 %v1195, %v1395
    %v1455 = vmul.f32 %v1197, %v1399
    %v1456 = vmul.f32 %v1199, %v1403
    %v1457 = vmul.f32 %v1201, %v1407
    %v1458 = vmul.f32 %v1203, %v1411
    %v1459 = vmul.f32 %v1205, %v1415
    %v1460 = vmul.f32 %v1207, %v1419
    %v1461 = vmul.f32 %v1209, %v1423
    %v1462 = vmul.f32 %v1211, %v1427
    %v1463 = vmul.f32 %v1213, %v1431
    %v1464 = vpack.c.bf16 %v1448, %v1448
    %v1465 = vpack.c.bf16 %v1449, %v1449
    %v1466 = vpack.c.bf16 %v1450, %v1450
    %v1467 = vpack.c.bf16 %v1451, %v1451
    %v1468 = vpack.c.bf16 %v1452, %v1452
    %v1469 = vpack.c.bf16 %v1453, %v1453
    %v1470 = vpack.c.bf16 %v1454, %v1454
    %v1471 = vpack.c.bf16 %v1455, %v1455
    %v1472 = vpack.c.bf16 %v1456, %v1456
    %v1473 = vpack.c.bf16 %v1457, %v1457
    %v1474 = vpack.c.bf16 %v1458, %v1458
    %v1475 = vpack.c.bf16 %v1459, %v1459
    %v1476 = vpack.c.bf16 %v1460, %v1460
    %v1477 = vpack.c.bf16 %v1461, %v1461
    %v1478 = vpack.c.bf16 %v1462, %v1462
    %v1479 = vpack.c.bf16 %v1463, %v1463
    %v1481 = vunpack.c.l.b16 %v1464
    %1482 = vset.pattern.permute.xlu0 0
    %1483 = vperm.xlu0 %1482, %v1481
    %v1484 = vpop.permute.xlu0 %1483
    %v1485 = vlaneseq
    %v1486 = vshrl.u32 %v1485, 7
    %v1487 = vsub.s32 %v989, %v1486
    %v1488 = vrot.slane %v1484, %v1487
    %v1489 = vpack.c.b16 %v1488, %v1488
    %v1491 = vsel %vm1077, %v1489, 0
    %vm1493 = vcmask 1043456
    %v1495 = vsel %vm1493, %v712, 0
    %1497 = vmatprep.subr.bf16.mxu0 0
    %1498 = vmatpush1.bf16.msra.mxu0 0
    %1499 = vmatprep.subr.bf16.mxu0 0
    %1500 = vmatpush1.bf16.msra.mxu0 0
    %1501 = vmatprep.subr.bf16.mxu0 0
    %1502 = vmatpush1.bf16.msra.mxu0 0
    %1503 = vmatprep.subr.bf16.mxu0 0
    %1504 = vmatpush1.bf16.msra.mxu0 0
    %1505 = vmatprep.subr.bf16.mxu0 0
    %1506 = vmatpush1.bf16.msra.mxu0 0
    %1507 = vmatprep.subr.bf16.mxu0 0
    %1508 = vmatpush1.bf16.msra.mxu0 0
    %1509 = vmatprep.subr.bf16.mxu0 0
    %1510 = vmatpush1.bf16.msra.mxu0 0
    %1511 = vmatprep.subr.bf16.mxu0 0
    %1512 = vmatpush1.bf16.msra.mxu0 %v1495
    %1513 = vmatprep.subr.bf16.mxu0 0
    %1514 = vmatpush2.bf16.msra.mxu0 0
    %1515 = vmatprep.subr.bf16.mxu0 0
    %1516 = vmatpush2.bf16.msra.mxu0 0
    %1517 = vmatprep.subr.bf16.mxu0 0
    %1518 = vmatpush2.bf16.msra.mxu0 0
    %1519 = vmatprep.subr.bf16.mxu0 0
    %1520 = vmatpush2.bf16.msra.mxu0 0
    %1521 = vmatprep.subr.bf16.mxu0 0
    %1522 = vmatpush2.bf16.msra.mxu0 0
    %1523 = vmatprep.subr.bf16.mxu0 0
    %1524 = vmatpush2.bf16.msra.mxu0 0
    %1525 = vmatprep.subr.bf16.mxu0 0
    %1526 = vmatpush2.bf16.msra.mxu0 0
    %1527 = vmatprep.subr.bf16.mxu0 0
    %1528 = vmatpush2.bf16.msra.mxu0 0
    %1529 = vmatprep.mubr.bf16.mxu0 0
    %1530 = vmatmul.mubr.bf16.gmra.mxu0 %v1491
    %v1531 = vpop.f32.mrf.mxu0
    %v1532 = vadd.f32 0.0, %v1531
    %v1533 = vpop.f32.mrf.mxu0
    %v1534 = vpop.f32.mrf.mxu0
    %v1535 = vpop.f32.mrf.mxu0
    %1536 = vdwg.mxu0
    %v1538 = vunpack.c.l.b16 %v1465
    %1539 = vset.pattern.permute.xlu0 0
    %1540 = vperm.xlu0 %1539, %v1538
    %v1541 = vpop.permute.xlu0 %1540
    %v1542 = vlaneseq
    %v1543 = vshrl.u32 %v1542, 7
    %v1544 = vsub.s32 %v989, %v1543
    %v1545 = vrot.slane %v1541, %v1544
    %v1546 = vpack.c.b16 %v1545, %v1545
    %v1548 = vsel %vm1077, %v1546, 0
    %v1551 = vsel %vm1493, %v713, 0
    %1553 = vmatprep.subr.bf16.mxu0 0
    %1554 = vmatpush1.bf16.msra.mxu0 0
    %1555 = vmatprep.subr.bf16.mxu0 0
    %1556 = vmatpush1.bf16.msra.mxu0 0
    %1557 = vmatprep.subr.bf16.mxu0 0
    %1558 = vmatpush1.bf16.msra.mxu0 0
    %1559 = vmatprep.subr.bf16.mxu0 0
    %1560 = vmatpush1.bf16.msra.mxu0 0
    %1561 = vmatprep.subr.bf16.mxu0 0
    %1562 = vmatpush1.bf16.msra.mxu0 0
    %1563 = vmatprep.subr.bf16.mxu0 0
    %1564 = vmatpush1.bf16.msra.mxu0 0
    %1565 = vmatprep.subr.bf16.mxu0 0
    %1566 = vmatpush1.bf16.msra.mxu0 0
    %1567 = vmatprep.subr.bf16.mxu0 0
    %1568 = vmatpush1.bf16.msra.mxu0 %v1551
    %1569 = vmatprep.subr.bf16.mxu0 0
    %1570 = vmatpush2.bf16.msra.mxu0 0
    %1571 = vmatprep.subr.bf16.mxu0 0
    %1572 = vmatpush2.bf16.msra.mxu0 0
    %1573 = vmatprep.subr.bf16.mxu0 0
    %1574 = vmatpush2.bf16.msra.mxu0 0
    %1575 = vmatprep.subr.bf16.mxu0 0
    %1576 = vmatpush2.bf16.msra.mxu0 0
    %1577 = vmatprep.subr.bf16.mxu0 0
    %1578 = vmatpush2.bf16.msra.mxu0 0
    %1579 = vmatprep.subr.bf16.mxu0 0
    %1580 = vmatpush2.bf16.msra.mxu0 0
    %1581 = vmatprep.subr.bf16.mxu0 0
    %1582 = vmatpush2.bf16.msra.mxu0 0
    %1583 = vmatprep.subr.bf16.mxu0 0
    %1584 = vmatpush2.bf16.msra.mxu0 0
    %1585 = vmatprep.mubr.bf16.mxu0 0
    %1586 = vmatmul.mubr.bf16.gmra.mxu0 %v1548
    %v1587 = vpop.f32.mrf.mxu0
    %v1588 = vadd.f32 0.0, %v1587
    %v1589 = vpop.f32.mrf.mxu0
    %v1590 = vpop.f32.mrf.mxu0
    %v1591 = vpop.f32.mrf.mxu0
    %1592 = vdwg.mxu0
    %v1594 = vunpack.c.l.b16 %v1466
    %1595 = vset.pattern.permute.xlu0 0
    %1596 = vperm.xlu0 %1595, %v1594
    %v1597 = vpop.permute.xlu0 %1596
    %v1598 = vlaneseq
    %v1599 = vshrl.u32 %v1598, 7
    %v1600 = vsub.s32 %v989, %v1599
    %v1601 = vrot.slane %v1597, %v1600
    %v1602 = vpack.c.b16 %v1601, %v1601
    %v1604 = vsel %vm1077, %v1602, 0
    %v1607 = vsel %vm1493, %v714, 0
    %1609 = vmatprep.subr.bf16.mxu0 0
    %1610 = vmatpush1.bf16.msra.mxu0 0
    %1611 = vmatprep.subr.bf16.mxu0 0
    %1612 = vmatpush1.bf16.msra.mxu0 0
    %1613 = vmatprep.subr.bf16.mxu0 0
    %1614 = vmatpush1.bf16.msra.mxu0 0
    %1615 = vmatprep.subr.bf16.mxu0 0
    %1616 = vmatpush1.bf16.msra.mxu0 0
    %1617 = vmatprep.subr.bf16.mxu0 0
    %1618 = vmatpush1.bf16.msra.mxu0 0
    %1619 = vmatprep.subr.bf16.mxu0 0
    %1620 = vmatpush1.bf16.msra.mxu0 0
    %1621 = vmatprep.subr.bf16.mxu0 0
    %1622 = vmatpush1.bf16.msra.mxu0 0
    %1623 = vmatprep.subr.bf16.mxu0 0
    %1624 = vmatpush1.bf16.msra.mxu0 %v1607
    %1625 = vmatprep.subr.bf16.mxu0 0
    %1626 = vmatpush2.bf16.msra.mxu0 0
    %1627 = vmatprep.subr.bf16.mxu0 0
    %1628 = vmatpush2.bf16.msra.mxu0 0
    %1629 = vmatprep.subr.bf16.mxu0 0
    %1630 = vmatpush2.bf16.msra.mxu0 0
    %1631 = vmatprep.subr.bf16.mxu0 0
    %1632 = vmatpush2.bf16.msra.mxu0 0
    %1633 = vmatprep.subr.bf16.mxu0 0
    %1634 = vmatpush2.bf16.msra.mxu0 0
    %1635 = vmatprep.subr.bf16.mxu0 0
    %1636 = vmatpush2.bf16.msra.mxu0 0
    %1637 = vmatprep.subr.bf16.mxu0 0
    %1638 = vmatpush2.bf16.msra.mxu0 0
    %1639 = vmatprep.subr.bf16.mxu0 0
    %1640 = vmatpush2.bf16.msra.mxu0 0
    %1641 = vmatprep.mubr.bf16.mxu0 0
    %1642 = vmatmul.mubr.bf16.gmra.mxu0 %v1604
    %v1643 = vpop.f32.mrf.mxu0
    %v1644 = vadd.f32 0.0, %v1643
    %v1645 = vpop.f32.mrf.mxu0
    %v1646 = vpop.f32.mrf.mxu0
    %v1647 = vpop.f32.mrf.mxu0
    %1648 = vdwg.mxu0
    %v1650 = vunpack.c.l.b16 %v1467
    %1651 = vset.pattern.permute.xlu0 0
    %1652 = vperm.xlu0 %1651, %v1650
    %v1653 = vpop.permute.xlu0 %1652
    %v1654 = vlaneseq
    %v1655 = vshrl.u32 %v1654, 7
    %v1656 = vsub.s32 %v989, %v1655
    %v1657 = vrot.slane %v1653, %v1656
    %v1658 = vpack.c.b16 %v1657, %v1657
    %v1660 = vsel %vm1077, %v1658, 0
    %v1663 = vsel %vm1493, %v715, 0
    %1665 = vmatprep.subr.bf16.mxu0 0
    %1666 = vmatpush1.bf16.msra.mxu0 0
    %1667 = vmatprep.subr.bf16.mxu0 0
    %1668 = vmatpush1.bf16.msra.mxu0 0
    %1669 = vmatprep.subr.bf16.mxu0 0
    %1670 = vmatpush1.bf16.msra.mxu0 0
    %1671 = vmatprep.subr.bf16.mxu0 0
    %1672 = vmatpush1.bf16.msra.mxu0 0
    %1673 = vmatprep.subr.bf16.mxu0 0
    %1674 = vmatpush1.bf16.msra.mxu0 0
    %1675 = vmatprep.subr.bf16.mxu0 0
    %1676 = vmatpush1.bf16.msra.mxu0 0
    %1677 = vmatprep.subr.bf16.mxu0 0
    %1678 = vmatpush1.bf16.msra.mxu0 0
    %1679 = vmatprep.subr.bf16.mxu0 0
    %1680 = vmatpush1.bf16.msra.mxu0 %v1663
    %1681 = vmatprep.subr.bf16.mxu0 0
    %1682 = vmatpush2.bf16.msra.mxu0 0
    %1683 = vmatprep.subr.bf16.mxu0 0
    %1684 = vmatpush2.bf16.msra.mxu0 0
    %1685 = vmatprep.subr.bf16.mxu0 0
    %1686 = vmatpush2.bf16.msra.mxu0 0
    %1687 = vmatprep.subr.bf16.mxu0 0
    %1688 = vmatpush2.bf16.msra.mxu0 0
    %1689 = vmatprep.subr.bf16.mxu0 0
    %1690 = vmatpush2.bf16.msra.mxu0 0
    %1691 = vmatprep.subr.bf16.mxu0 0
    %1692 = vmatpush2.bf16.msra.mxu0 0
    %1693 = vmatprep.subr.bf16.mxu0 0
    %1694 = vmatpush2.bf16.msra.mxu0 0
    %1695 = vmatprep.subr.bf16.mxu0 0
    %1696 = vmatpush2.bf16.msra.mxu0 0
    %1697 = vmatprep.mubr.bf16.mxu0 0
    %1698 = vmatmul.mubr.bf16.gmra.mxu0 %v1660
    %v1699 = vpop.f32.mrf.mxu0
    %v1700 = vadd.f32 0.0, %v1699
    %v1701 = vpop.f32.mrf.mxu0
    %v1702 = vpop.f32.mrf.mxu0
    %v1703 = vpop.f32.mrf.mxu0
    %1704 = vdwg.mxu0
    %v1706 = vunpack.c.l.b16 %v1468
    %1707 = vset.pattern.permute.xlu0 0
    %1708 = vperm.xlu0 %1707, %v1706
    %v1709 = vpop.permute.xlu0 %1708
    %v1710 = vlaneseq
    %v1711 = vshrl.u32 %v1710, 7
    %v1712 = vsub.s32 %v989, %v1711
    %v1713 = vrot.slane %v1709, %v1712
    %v1714 = vpack.c.b16 %v1713, %v1713
    %v1716 = vsel %vm1077, %v1714, 0
    %v1719 = vsel %vm1493, %v716, 0
    %1721 = vmatprep.subr.bf16.mxu0 0
    %1722 = vmatpush1.bf16.msra.mxu0 0
    %1723 = vmatprep.subr.bf16.mxu0 0
    %1724 = vmatpush1.bf16.msra.mxu0 0
    %1725 = vmatprep.subr.bf16.mxu0 0
    %1726 = vmatpush1.bf16.msra.mxu0 0
    %1727 = vmatprep.subr.bf16.mxu0 0
    %1728 = vmatpush1.bf16.msra.mxu0 0
    %1729 = vmatprep.subr.bf16.mxu0 0
    %1730 = vmatpush1.bf16.msra.mxu0 0
    %1731 = vmatprep.subr.bf16.mxu0 0
    %1732 = vmatpush1.bf16.msra.mxu0 0
    %1733 = vmatprep.subr.bf16.mxu0 0
    %1734 = vmatpush1.bf16.msra.mxu0 0
    %1735 = vmatprep.subr.bf16.mxu0 0
    %1736 = vmatpush1.bf16.msra.mxu0 %v1719
    %1737 = vmatprep.subr.bf16.mxu0 0
    %1738 = vmatpush2.bf16.msra.mxu0 0
    %1739 = vmatprep.subr.bf16.mxu0 0
    %1740 = vmatpush2.bf16.msra.mxu0 0
    %1741 = vmatprep.subr.bf16.mxu0 0
    %1742 = vmatpush2.bf16.msra.mxu0 0
    %1743 = vmatprep.subr.bf16.mxu0 0
    %1744 = vmatpush2.bf16.msra.mxu0 0
    %1745 = vmatprep.subr.bf16.mxu0 0
    %1746 = vmatpush2.bf16.msra.mxu0 0
    %1747 = vmatprep.subr.bf16.mxu0 0
    %1748 = vmatpush2.bf16.msra.mxu0 0
    %1749 = vmatprep.subr.bf16.mxu0 0
    %1750 = vmatpush2.bf16.msra.mxu0 0
    %1751 = vmatprep.subr.bf16.mxu0 0
    %1752 = vmatpush2.bf16.msra.mxu0 0
    %1753 = vmatprep.mubr.bf16.mxu0 0
    %1754 = vmatmul.mubr.bf16.gmra.mxu0 %v1716
    %v1755 = vpop.f32.mrf.mxu0
    %v1756 = vadd.f32 0.0, %v1755
    %v1757 = vpop.f32.mrf.mxu0
    %v1758 = vpop.f32.mrf.mxu0
    %v1759 = vpop.f32.mrf.mxu0
    %1760 = vdwg.mxu0
    %v1762 = vunpack.c.l.b16 %v1469
    %1763 = vset.pattern.permute.xlu0 0
    %1764 = vperm.xlu0 %1763, %v1762
    %v1765 = vpop.permute.xlu0 %1764
    %v1766 = vlaneseq
    %v1767 = vshrl.u32 %v1766, 7
    %v1768 = vsub.s32 %v989, %v1767
    %v1769 = vrot.slane %v1765, %v1768
    %v1770 = vpack.c.b16 %v1769, %v1769
    %v1772 = vsel %vm1077, %v1770, 0
    %v1775 = vsel %vm1493, %v717, 0
    %1777 = vmatprep.subr.bf16.mxu0 0
    %1778 = vmatpush1.bf16.msra.mxu0 0
    %1779 = vmatprep.subr.bf16.mxu0 0
    %1780 = vmatpush1.bf16.msra.mxu0 0
    %1781 = vmatprep.subr.bf16.mxu0 0
    %1782 = vmatpush1.bf16.msra.mxu0 0
    %1783 = vmatprep.subr.bf16.mxu0 0
    %1784 = vmatpush1.bf16.msra.mxu0 0
    %1785 = vmatprep.subr.bf16.mxu0 0
    %1786 = vmatpush1.bf16.msra.mxu0 0
    %1787 = vmatprep.subr.bf16.mxu0 0
    %1788 = vmatpush1.bf16.msra.mxu0 0
    %1789 = vmatprep.subr.bf16.mxu0 0
    %1790 = vmatpush1.bf16.msra.mxu0 0
    %1791 = vmatprep.subr.bf16.mxu0 0
    %1792 = vmatpush1.bf16.msra.mxu0 %v1775
    %1793 = vmatprep.subr.bf16.mxu0 0
    %1794 = vmatpush2.bf16.msra.mxu0 0
    %1795 = vmatprep.subr.bf16.mxu0 0
    %1796 = vmatpush2.bf16.msra.mxu0 0
    %1797 = vmatprep.subr.bf16.mxu0 0
    %1798 = vmatpush2.bf16.msra.mxu0 0
    %1799 = vmatprep.subr.bf16.mxu0 0
    %1800 = vmatpush2.bf16.msra.mxu0 0
    %1801 = vmatprep.subr.bf16.mxu0 0
    %1802 = vmatpush2.bf16.msra.mxu0 0
    %1803 = vmatprep.subr.bf16.mxu0 0
    %1804 = vmatpush2.bf16.msra.mxu0 0
    %1805 = vmatprep.subr.bf16.mxu0 0
    %1806 = vmatpush2.bf16.msra.mxu0 0
    %1807 = vmatprep.subr.bf16.mxu0 0
    %1808 = vmatpush2.bf16.msra.mxu0 0
    %1809 = vmatprep.mubr.bf16.mxu0 0
    %1810 = vmatmul.mubr.bf16.gmra.mxu0 %v1772
    %v1811 = vpop.f32.mrf.mxu0
    %v1812 = vadd.f32 0.0, %v1811
    %v1813 = vpop.f32.mrf.mxu0
    %v1814 = vpop.f32.mrf.mxu0
    %v1815 = vpop.f32.mrf.mxu0
    %1816 = vdwg.mxu0
    %v1818 = vunpack.c.l.b16 %v1470
    %1819 = vset.pattern.permute.xlu0 0
    %1820 = vperm.xlu0 %1819, %v1818
    %v1821 = vpop.permute.xlu0 %1820
    %v1822 = vlaneseq
    %v1823 = vshrl.u32 %v1822, 7
    %v1824 = vsub.s32 %v989, %v1823
    %v1825 = vrot.slane %v1821, %v1824
    %v1826 = vpack.c.b16 %v1825, %v1825
    %v1828 = vsel %vm1077, %v1826, 0
    %v1831 = vsel %vm1493, %v718, 0
    %1833 = vmatprep.subr.bf16.mxu0 0
    %1834 = vmatpush1.bf16.msra.mxu0 0
    %1835 = vmatprep.subr.bf16.mxu0 0
    %1836 = vmatpush1.bf16.msra.mxu0 0
    %1837 = vmatprep.subr.bf16.mxu0 0
    %1838 = vmatpush1.bf16.msra.mxu0 0
    %1839 = vmatprep.subr.bf16.mxu0 0
    %1840 = vmatpush1.bf16.msra.mxu0 0
    %1841 = vmatprep.subr.bf16.mxu0 0
    %1842 = vmatpush1.bf16.msra.mxu0 0
    %1843 = vmatprep.subr.bf16.mxu0 0
    %1844 = vmatpush1.bf16.msra.mxu0 0
    %1845 = vmatprep.subr.bf16.mxu0 0
    %1846 = vmatpush1.bf16.msra.mxu0 0
    %1847 = vmatprep.subr.bf16.mxu0 0
    %1848 = vmatpush1.bf16.msra.mxu0 %v1831
    %1849 = vmatprep.subr.bf16.mxu0 0
    %1850 = vmatpush2.bf16.msra.mxu0 0
    %1851 = vmatprep.subr.bf16.mxu0 0
    %1852 = vmatpush2.bf16.msra.mxu0 0
    %1853 = vmatprep.subr.bf16.mxu0 0
    %1854 = vmatpush2.bf16.msra.mxu0 0
    %1855 = vmatprep.subr.bf16.mxu0 0
    %1856 = vmatpush2.bf16.msra.mxu0 0
    %1857 = vmatprep.subr.bf16.mxu0 0
    %1858 = vmatpush2.bf16.msra.mxu0 0
    %1859 = vmatprep.subr.bf16.mxu0 0
    %1860 = vmatpush2.bf16.msra.mxu0 0
    %1861 = vmatprep.subr.bf16.mxu0 0
    %1862 = vmatpush2.bf16.msra.mxu0 0
    %1863 = vmatprep.subr.bf16.mxu0 0
    %1864 = vmatpush2.bf16.msra.mxu0 0
    %1865 = vmatprep.mubr.bf16.mxu0 0
    %1866 = vmatmul.mubr.bf16.gmra.mxu0 %v1828
    %v1867 = vpop.f32.mrf.mxu0
    %v1868 = vadd.f32 0.0, %v1867
    %v1869 = vpop.f32.mrf.mxu0
    %v1870 = vpop.f32.mrf.mxu0
    %v1871 = vpop.f32.mrf.mxu0
    %1872 = vdwg.mxu0
    %v1874 = vunpack.c.l.b16 %v1471
    %1875 = vset.pattern.permute.xlu0 0
    %1876 = vperm.xlu0 %1875, %v1874
    %v1877 = vpop.permute.xlu0 %1876
    %v1878 = vlaneseq
    %v1879 = vshrl.u32 %v1878, 7
    %v1880 = vsub.s32 %v989, %v1879
    %v1881 = vrot.slane %v1877, %v1880
    %v1882 = vpack.c.b16 %v1881, %v1881
    %v1884 = vsel %vm1077, %v1882, 0
    %v1887 = vsel %vm1493, %v719, 0
    %1889 = vmatprep.subr.bf16.mxu0 0
    %1890 = vmatpush1.bf16.msra.mxu0 0
    %1891 = vmatprep.subr.bf16.mxu0 0
    %1892 = vmatpush1.bf16.msra.mxu0 0
    %1893 = vmatprep.subr.bf16.mxu0 0
    %1894 = vmatpush1.bf16.msra.mxu0 0
    %1895 = vmatprep.subr.bf16.mxu0 0
    %1896 = vmatpush1.bf16.msra.mxu0 0
    %1897 = vmatprep.subr.bf16.mxu0 0
    %1898 = vmatpush1.bf16.msra.mxu0 0
    %1899 = vmatprep.subr.bf16.mxu0 0
    %1900 = vmatpush1.bf16.msra.mxu0 0
    %1901 = vmatprep.subr.bf16.mxu0 0
    %1902 = vmatpush1.bf16.msra.mxu0 0
    %1903 = vmatprep.subr.bf16.mxu0 0
    %1904 = vmatpush1.bf16.msra.mxu0 %v1887
    %1905 = vmatprep.subr.bf16.mxu0 0
    %1906 = vmatpush2.bf16.msra.mxu0 0
    %1907 = vmatprep.subr.bf16.mxu0 0
    %1908 = vmatpush2.bf16.msra.mxu0 0
    %1909 = vmatprep.subr.bf16.mxu0 0
    %1910 = vmatpush2.bf16.msra.mxu0 0
    %1911 = vmatprep.subr.bf16.mxu0 0
    %1912 = vmatpush2.bf16.msra.mxu0 0
    %1913 = vmatprep.subr.bf16.mxu0 0
    %1914 = vmatpush2.bf16.msra.mxu0 0
    %1915 = vmatprep.subr.bf16.mxu0 0
    %1916 = vmatpush2.bf16.msra.mxu0 0
    %1917 = vmatprep.subr.bf16.mxu0 0
    %1918 = vmatpush2.bf16.msra.mxu0 0
    %1919 = vmatprep.subr.bf16.mxu0 0
    %1920 = vmatpush2.bf16.msra.mxu0 0
    %1921 = vmatprep.mubr.bf16.mxu0 0
    %1922 = vmatmul.mubr.bf16.gmra.mxu0 %v1884
    %v1923 = vpop.f32.mrf.mxu0
    %v1924 = vadd.f32 0.0, %v1923
    %v1925 = vpop.f32.mrf.mxu0
    %v1926 = vpop.f32.mrf.mxu0
    %v1927 = vpop.f32.mrf.mxu0
    %1928 = vdwg.mxu0
    %v1930 = vunpack.c.l.b16 %v1472
    %1931 = vset.pattern.permute.xlu0 0
    %1932 = vperm.xlu0 %1931, %v1930
    %v1933 = vpop.permute.xlu0 %1932
    %v1934 = vlaneseq
    %v1935 = vshrl.u32 %v1934, 7
    %v1936 = vsub.s32 %v989, %v1935
    %v1937 = vrot.slane %v1933, %v1936
    %v1938 = vpack.c.b16 %v1937, %v1937
    %v1940 = vsel %vm1077, %v1938, 0
    %v1943 = vsel %vm1493, %v720, 0
    %1945 = vmatprep.subr.bf16.mxu0 0
    %1946 = vmatpush1.bf16.msra.mxu0 0
    %1947 = vmatprep.subr.bf16.mxu0 0
    %1948 = vmatpush1.bf16.msra.mxu0 0
    %1949 = vmatprep.subr.bf16.mxu0 0
    %1950 = vmatpush1.bf16.msra.mxu0 0
    %1951 = vmatprep.subr.bf16.mxu0 0
    %1952 = vmatpush1.bf16.msra.mxu0 0
    %1953 = vmatprep.subr.bf16.mxu0 0
    %1954 = vmatpush1.bf16.msra.mxu0 0
    %1955 = vmatprep.subr.bf16.mxu0 0
    %1956 = vmatpush1.bf16.msra.mxu0 0
    %1957 = vmatprep.subr.bf16.mxu0 0
    %1958 = vmatpush1.bf16.msra.mxu0 0
    %1959 = vmatprep.subr.bf16.mxu0 0
    %1960 = vmatpush1.bf16.msra.mxu0 %v1943
    %1961 = vmatprep.subr.bf16.mxu0 0
    %1962 = vmatpush2.bf16.msra.mxu0 0
    %1963 = vmatprep.subr.bf16.mxu0 0
    %1964 = vmatpush2.bf16.msra.mxu0 0
    %1965 = vmatprep.subr.bf16.mxu0 0
    %1966 = vmatpush2.bf16.msra.mxu0 0
    %1967 = vmatprep.subr.bf16.mxu0 0
    %1968 = vmatpush2.bf16.msra.mxu0 0
    %1969 = vmatprep.subr.bf16.mxu0 0
    %1970 = vmatpush2.bf16.msra.mxu0 0
    %1971 = vmatprep.subr.bf16.mxu0 0
    %1972 = vmatpush2.bf16.msra.mxu0 0
    %1973 = vmatprep.subr.bf16.mxu0 0
    %1974 = vmatpush2.bf16.msra.mxu0 0
    %1975 = vmatprep.subr.bf16.mxu0 0
    %1976 = vmatpush2.bf16.msra.mxu0 0
    %1977 = vmatprep.mubr.bf16.mxu0 0
    %1978 = vmatmul.mubr.bf16.gmra.mxu0 %v1940
    %v1979 = vpop.f32.mrf.mxu0
    %v1980 = vadd.f32 0.0, %v1979
    %v1981 = vpop.f32.mrf.mxu0
    %v1982 = vpop.f32.mrf.mxu0
    %v1983 = vpop.f32.mrf.mxu0
    %1984 = vdwg.mxu0
    %v1986 = vunpack.c.l.b16 %v1473
    %1987 = vset.pattern.permute.xlu0 0
    %1988 = vperm.xlu0 %1987, %v1986
    %v1989 = vpop.permute.xlu0 %1988
    %v1990 = vlaneseq
    %v1991 = vshrl.u32 %v1990, 7
    %v1992 = vsub.s32 %v989, %v1991
    %v1993 = vrot.slane %v1989, %v1992
    %v1994 = vpack.c.b16 %v1993, %v1993
    %v1996 = vsel %vm1077, %v1994, 0
    %v1999 = vsel %vm1493, %v721, 0
    %2001 = vmatprep.subr.bf16.mxu0 0
    %2002 = vmatpush1.bf16.msra.mxu0 0
    %2003 = vmatprep.subr.bf16.mxu0 0
    %2004 = vmatpush1.bf16.msra.mxu0 0
    %2005 = vmatprep.subr.bf16.mxu0 0
    %2006 = vmatpush1.bf16.msra.mxu0 0
    %2007 = vmatprep.subr.bf16.mxu0 0
    %2008 = vmatpush1.bf16.msra.mxu0 0
    %2009 = vmatprep.subr.bf16.mxu0 0
    %2010 = vmatpush1.bf16.msra.mxu0 0
    %2011 = vmatprep.subr.bf16.mxu0 0
    %2012 = vmatpush1.bf16.msra.mxu0 0
    %2013 = vmatprep.subr.bf16.mxu0 0
    %2014 = vmatpush1.bf16.msra.mxu0 0
    %2015 = vmatprep.subr.bf16.mxu0 0
    %2016 = vmatpush1.bf16.msra.mxu0 %v1999
    %2017 = vmatprep.subr.bf16.mxu0 0
    %2018 = vmatpush2.bf16.msra.mxu0 0
    %2019 = vmatprep.subr.bf16.mxu0 0
    %2020 = vmatpush2.bf16.msra.mxu0 0
    %2021 = vmatprep.subr.bf16.mxu0 0
    %2022 = vmatpush2.bf16.msra.mxu0 0
    %2023 = vmatprep.subr.bf16.mxu0 0
    %2024 = vmatpush2.bf16.msra.mxu0 0
    %2025 = vmatprep.subr.bf16.mxu0 0
    %2026 = vmatpush2.bf16.msra.mxu0 0
    %2027 = vmatprep.subr.bf16.mxu0 0
    %2028 = vmatpush2.bf16.msra.mxu0 0
    %2029 = vmatprep.subr.bf16.mxu0 0
    %2030 = vmatpush2.bf16.msra.mxu0 0
    %2031 = vmatprep.subr.bf16.mxu0 0
    %2032 = vmatpush2.bf16.msra.mxu0 0
    %2033 = vmatprep.mubr.bf16.mxu0 0
    %2034 = vmatmul.mubr.bf16.gmra.mxu0 %v1996
    %v2035 = vpop.f32.mrf.mxu0
    %v2036 = vadd.f32 0.0, %v2035
    %v2037 = vpop.f32.mrf.mxu0
    %v2038 = vpop.f32.mrf.mxu0
    %v2039 = vpop.f32.mrf.mxu0
    %2040 = vdwg.mxu0
    %v2042 = vunpack.c.l.b16 %v1474
    %2043 = vset.pattern.permute.xlu0 0
    %2044 = vperm.xlu0 %2043, %v2042
    %v2045 = vpop.permute.xlu0 %2044
    %v2046 = vlaneseq
    %v2047 = vshrl.u32 %v2046, 7
    %v2048 = vsub.s32 %v989, %v2047
    %v2049 = vrot.slane %v2045, %v2048
    %v2050 = vpack.c.b16 %v2049, %v2049
    %v2052 = vsel %vm1077, %v2050, 0
    %v2055 = vsel %vm1493, %v722, 0
    %2057 = vmatprep.subr.bf16.mxu0 0
    %2058 = vmatpush1.bf16.msra.mxu0 0
    %2059 = vmatprep.subr.bf16.mxu0 0
    %2060 = vmatpush1.bf16.msra.mxu0 0
    %2061 = vmatprep.subr.bf16.mxu0 0
    %2062 = vmatpush1.bf16.msra.mxu0 0
    %2063 = vmatprep.subr.bf16.mxu0 0
    %2064 = vmatpush1.bf16.msra.mxu0 0
    %2065 = vmatprep.subr.bf16.mxu0 0
    %2066 = vmatpush1.bf16.msra.mxu0 0
    %2067 = vmatprep.subr.bf16.mxu0 0
    %2068 = vmatpush1.bf16.msra.mxu0 0
    %2069 = vmatprep.subr.bf16.mxu0 0
    %2070 = vmatpush1.bf16.msra.mxu0 0
    %2071 = vmatprep.subr.bf16.mxu0 0
    %2072 = vmatpush1.bf16.msra.mxu0 %v2055
    %2073 = vmatprep.subr.bf16.mxu0 0
    %2074 = vmatpush2.bf16.msra.mxu0 0
    %2075 = vmatprep.subr.bf16.mxu0 0
    %2076 = vmatpush2.bf16.msra.mxu0 0
    %2077 = vmatprep.subr.bf16.mxu0 0
    %2078 = vmatpush2.bf16.msra.mxu0 0
    %2079 = vmatprep.subr.bf16.mxu0 0
    %2080 = vmatpush2.bf16.msra.mxu0 0
    %2081 = vmatprep.subr.bf16.mxu0 0
    %2082 = vmatpush2.bf16.msra.mxu0 0
    %2083 = vmatprep.subr.bf16.mxu0 0
    %2084 = vmatpush2.bf16.msra.mxu0 0
    %2085 = vmatprep.subr.bf16.mxu0 0
    %2086 = vmatpush2.bf16.msra.mxu0 0
    %2087 = vmatprep.subr.bf16.mxu0 0
    %2088 = vmatpush2.bf16.msra.mxu0 0
    %2089 = vmatprep.mubr.bf16.mxu0 0
    %2090 = vmatmul.mubr.bf16.gmra.mxu0 %v2052
    %v2091 = vpop.f32.mrf.mxu0
    %v2092 = vadd.f32 0.0, %v2091
    %v2093 = vpop.f32.mrf.mxu0
    %v2094 = vpop.f32.mrf.mxu0
    %v2095 = vpop.f32.mrf.mxu0
    %2096 = vdwg.mxu0
    %v2098 = vunpack.c.l.b16 %v1475
    %2099 = vset.pattern.permute.xlu0 0
    %2100 = vperm.xlu0 %2099, %v2098
    %v2101 = vpop.permute.xlu0 %2100
    %v2102 = vlaneseq
    %v2103 = vshrl.u32 %v2102, 7
    %v2104 = vsub.s32 %v989, %v2103
    %v2105 = vrot.slane %v2101, %v2104
    %v2106 = vpack.c.b16 %v2105, %v2105
    %v2108 = vsel %vm1077, %v2106, 0
    %v2111 = vsel %vm1493, %v723, 0
    %2113 = vmatprep.subr.bf16.mxu0 0
    %2114 = vmatpush1.bf16.msra.mxu0 0
    %2115 = vmatprep.subr.bf16.mxu0 0
    %2116 = vmatpush1.bf16.msra.mxu0 0
    %2117 = vmatprep.subr.bf16.mxu0 0
    %2118 = vmatpush1.bf16.msra.mxu0 0
    %2119 = vmatprep.subr.bf16.mxu0 0
    %2120 = vmatpush1.bf16.msra.mxu0 0
    %2121 = vmatprep.subr.bf16.mxu0 0
    %2122 = vmatpush1.bf16.msra.mxu0 0
    %2123 = vmatprep.subr.bf16.mxu0 0
    %2124 = vmatpush1.bf16.msra.mxu0 0
    %2125 = vmatprep.subr.bf16.mxu0 0
    %2126 = vmatpush1.bf16.msra.mxu0 0
    %2127 = vmatprep.subr.bf16.mxu0 0
    %2128 = vmatpush1.bf16.msra.mxu0 %v2111
    %2129 = vmatprep.subr.bf16.mxu0 0
    %2130 = vmatpush2.bf16.msra.mxu0 0
    %2131 = vmatprep.subr.bf16.mxu0 0
    %2132 = vmatpush2.bf16.msra.mxu0 0
    %2133 = vmatprep.subr.bf16.mxu0 0
    %2134 = vmatpush2.bf16.msra.mxu0 0
    %2135 = vmatprep.subr.bf16.mxu0 0
    %2136 = vmatpush2.bf16.msra.mxu0 0
    %2137 = vmatprep.subr.bf16.mxu0 0
    %2138 = vmatpush2.bf16.msra.mxu0 0
    %2139 = vmatprep.subr.bf16.mxu0 0
    %2140 = vmatpush2.bf16.msra.mxu0 0
    %2141 = vmatprep.subr.bf16.mxu0 0
    %2142 = vmatpush2.bf16.msra.mxu0 0
    %2143 = vmatprep.subr.bf16.mxu0 0
    %2144 = vmatpush2.bf16.msra.mxu0 0
    %2145 = vmatprep.mubr.bf16.mxu0 0
    %2146 = vmatmul.mubr.bf16.gmra.mxu0 %v2108
    %v2147 = vpop.f32.mrf.mxu0
    %v2148 = vadd.f32 0.0, %v2147
    %v2149 = vpop.f32.mrf.mxu0
    %v2150 = vpop.f32.mrf.mxu0
    %v2151 = vpop.f32.mrf.mxu0
    %2152 = vdwg.mxu0
    %v2154 = vunpack.c.l.b16 %v1476
    %2155 = vset.pattern.permute.xlu0 0
    %2156 = vperm.xlu0 %2155, %v2154
    %v2157 = vpop.permute.xlu0 %2156
    %v2158 = vlaneseq
    %v2159 = vshrl.u32 %v2158, 7
    %v2160 = vsub.s32 %v989, %v2159
    %v2161 = vrot.slane %v2157, %v2160
    %v2162 = vpack.c.b16 %v2161, %v2161
    %v2164 = vsel %vm1077, %v2162, 0
    %v2167 = vsel %vm1493, %v724, 0
    %2169 = vmatprep.subr.bf16.mxu0 0
    %2170 = vmatpush1.bf16.msra.mxu0 0
    %2171 = vmatprep.subr.bf16.mxu0 0
    %2172 = vmatpush1.bf16.msra.mxu0 0
    %2173 = vmatprep.subr.bf16.mxu0 0
    %2174 = vmatpush1.bf16.msra.mxu0 0
    %2175 = vmatprep.subr.bf16.mxu0 0
    %2176 = vmatpush1.bf16.msra.mxu0 0
    %2177 = vmatprep.subr.bf16.mxu0 0
    %2178 = vmatpush1.bf16.msra.mxu0 0
    %2179 = vmatprep.subr.bf16.mxu0 0
    %2180 = vmatpush1.bf16.msra.mxu0 0
    %2181 = vmatprep.subr.bf16.mxu0 0
    %2182 = vmatpush1.bf16.msra.mxu0 0
    %2183 = vmatprep.subr.bf16.mxu0 0
    %2184 = vmatpush1.bf16.msra.mxu0 %v2167
    %2185 = vmatprep.subr.bf16.mxu0 0
    %2186 = vmatpush2.bf16.msra.mxu0 0
    %2187 = vmatprep.subr.bf16.mxu0 0
    %2188 = vmatpush2.bf16.msra.mxu0 0
    %2189 = vmatprep.subr.bf16.mxu0 0
    %2190 = vmatpush2.bf16.msra.mxu0 0
    %2191 = vmatprep.subr.bf16.mxu0 0
    %2192 = vmatpush2.bf16.msra.mxu0 0
    %2193 = vmatprep.subr.bf16.mxu0 0
    %2194 = vmatpush2.bf16.msra.mxu0 0
    %2195 = vmatprep.subr.bf16.mxu0 0
    %2196 = vmatpush2.bf16.msra.mxu0 0
    %2197 = vmatprep.subr.bf16.mxu0 0
    %2198 = vmatpush2.bf16.msra.mxu0 0
    %2199 = vmatprep.subr.bf16.mxu0 0
    %2200 = vmatpush2.bf16.msra.mxu0 0
    %2201 = vmatprep.mubr.bf16.mxu0 0
    %2202 = vmatmul.mubr.bf16.gmra.mxu0 %v2164
    %v2203 = vpop.f32.mrf.mxu0
    %v2204 = vadd.f32 0.0, %v2203
    %v2205 = vpop.f32.mrf.mxu0
    %v2206 = vpop.f32.mrf.mxu0
    %v2207 = vpop.f32.mrf.mxu0
    %2208 = vdwg.mxu0
    %v2210 = vunpack.c.l.b16 %v1477
    %2211 = vset.pattern.permute.xlu0 0
    %2212 = vperm.xlu0 %2211, %v2210
    %v2213 = vpop.permute.xlu0 %2212
    %v2214 = vlaneseq
    %v2215 = vshrl.u32 %v2214, 7
    %v2216 = vsub.s32 %v989, %v2215
    %v2217 = vrot.slane %v2213, %v2216
    %v2218 = vpack.c.b16 %v2217, %v2217
    %v2220 = vsel %vm1077, %v2218, 0
    %v2223 = vsel %vm1493, %v725, 0
    %2225 = vmatprep.subr.bf16.mxu0 0
    %2226 = vmatpush1.bf16.msra.mxu0 0
    %2227 = vmatprep.subr.bf16.mxu0 0
    %2228 = vmatpush1.bf16.msra.mxu0 0
    %2229 = vmatprep.subr.bf16.mxu0 0
    %2230 = vmatpush1.bf16.msra.mxu0 0
    %2231 = vmatprep.subr.bf16.mxu0 0
    %2232 = vmatpush1.bf16.msra.mxu0 0
    %2233 = vmatprep.subr.bf16.mxu0 0
    %2234 = vmatpush1.bf16.msra.mxu0 0
    %2235 = vmatprep.subr.bf16.mxu0 0
    %2236 = vmatpush1.bf16.msra.mxu0 0
    %2237 = vmatprep.subr.bf16.mxu0 0
    %2238 = vmatpush1.bf16.msra.mxu0 0
    %2239 = vmatprep.subr.bf16.mxu0 0
    %2240 = vmatpush1.bf16.msra.mxu0 %v2223
    %2241 = vmatprep.subr.bf16.mxu0 0
    %2242 = vmatpush2.bf16.msra.mxu0 0
    %2243 = vmatprep.subr.bf16.mxu0 0
    %2244 = vmatpush2.bf16.msra.mxu0 0
    %2245 = vmatprep.subr.bf16.mxu0 0
    %2246 = vmatpush2.bf16.msra.mxu0 0
    %2247 = vmatprep.subr.bf16.mxu0 0
    %2248 = vmatpush2.bf16.msra.mxu0 0
    %2249 = vmatprep.subr.bf16.mxu0 0
    %2250 = vmatpush2.bf16.msra.mxu0 0
    %2251 = vmatprep.subr.bf16.mxu0 0
    %2252 = vmatpush2.bf16.msra.mxu0 0
    %2253 = vmatprep.subr.bf16.mxu0 0
    %2254 = vmatpush2.bf16.msra.mxu0 0
    %2255 = vmatprep.subr.bf16.mxu0 0
    %2256 = vmatpush2.bf16.msra.mxu0 0
    %2257 = vmatprep.mubr.bf16.mxu0 0
    %2258 = vmatmul.mubr.bf16.gmra.mxu0 %v2220
    %v2259 = vpop.f32.mrf.mxu0
    %v2260 = vadd.f32 0.0, %v2259
    %v2261 = vpop.f32.mrf.mxu0
    %v2262 = vpop.f32.mrf.mxu0
    %v2263 = vpop.f32.mrf.mxu0
    %2264 = vdwg.mxu0
    %v2266 = vunpack.c.l.b16 %v1478
    %2267 = vset.pattern.permute.xlu0 0
    %2268 = vperm.xlu0 %2267, %v2266
    %v2269 = vpop.permute.xlu0 %2268
    %v2270 = vlaneseq
    %v2271 = vshrl.u32 %v2270, 7
    %v2272 = vsub.s32 %v989, %v2271
    %v2273 = vrot.slane %v2269, %v2272
    %v2274 = vpack.c.b16 %v2273, %v2273
    %v2276 = vsel %vm1077, %v2274, 0
    %v2279 = vsel %vm1493, %v726, 0
    %2281 = vmatprep.subr.bf16.mxu0 0
    %2282 = vmatpush1.bf16.msra.mxu0 0
    %2283 = vmatprep.subr.bf16.mxu0 0
    %2284 = vmatpush1.bf16.msra.mxu0 0
    %2285 = vmatprep.subr.bf16.mxu0 0
    %2286 = vmatpush1.bf16.msra.mxu0 0
    %2287 = vmatprep.subr.bf16.mxu0 0
    %2288 = vmatpush1.bf16.msra.mxu0 0
    %2289 = vmatprep.subr.bf16.mxu0 0
    %2290 = vmatpush1.bf16.msra.mxu0 0
    %2291 = vmatprep.subr.bf16.mxu0 0
    %2292 = vmatpush1.bf16.msra.mxu0 0
    %2293 = vmatprep.subr.bf16.mxu0 0
    %2294 = vmatpush1.bf16.msra.mxu0 0
    %2295 = vmatprep.subr.bf16.mxu0 0
    %2296 = vmatpush1.bf16.msra.mxu0 %v2279
    %2297 = vmatprep.subr.bf16.mxu0 0
    %2298 = vmatpush2.bf16.msra.mxu0 0
    %2299 = vmatprep.subr.bf16.mxu0 0
    %2300 = vmatpush2.bf16.msra.mxu0 0
    %2301 = vmatprep.subr.bf16.mxu0 0
    %2302 = vmatpush2.bf16.msra.mxu0 0
    %2303 = vmatprep.subr.bf16.mxu0 0
    %2304 = vmatpush2.bf16.msra.mxu0 0
    %2305 = vmatprep.subr.bf16.mxu0 0
    %2306 = vmatpush2.bf16.msra.mxu0 0
    %2307 = vmatprep.subr.bf16.mxu0 0
    %2308 = vmatpush2.bf16.msra.mxu0 0
    %2309 = vmatprep.subr.bf16.mxu0 0
    %2310 = vmatpush2.bf16.msra.mxu0 0
    %2311 = vmatprep.subr.bf16.mxu0 0
    %2312 = vmatpush2.bf16.msra.mxu0 0
    %2313 = vmatprep.mubr.bf16.mxu0 0
    %2314 = vmatmul.mubr.bf16.gmra.mxu0 %v2276
    %v2315 = vpop.f32.mrf.mxu0
    %v2316 = vadd.f32 0.0, %v2315
    %v2317 = vpop.f32.mrf.mxu0
    %v2318 = vpop.f32.mrf.mxu0
    %v2319 = vpop.f32.mrf.mxu0
    %2320 = vdwg.mxu0
    %v2322 = vunpack.c.l.b16 %v1479
    %2323 = vset.pattern.permute.xlu0 0
    %2324 = vperm.xlu0 %2323, %v2322
    %v2325 = vpop.permute.xlu0 %2324
    %v2326 = vlaneseq
    %v2327 = vshrl.u32 %v2326, 7
    %v2328 = vsub.s32 %v989, %v2327
    %v2329 = vrot.slane %v2325, %v2328
    %v2330 = vpack.c.b16 %v2329, %v2329
    %v2332 = vsel %vm1077, %v2330, 0
    %v2335 = vsel %vm1493, %v727, 0
    %2337 = vmatprep.subr.bf16.mxu0 0
    %2338 = vmatpush1.bf16.msra.mxu0 0
    %2339 = vmatprep.subr.bf16.mxu0 0
    %2340 = vmatpush1.bf16.msra.mxu0 0
    %2341 = vmatprep.subr.bf16.mxu0 0
    %2342 = vmatpush1.bf16.msra.mxu0 0
    %2343 = vmatprep.subr.bf16.mxu0 0
    %2344 = vmatpush1.bf16.msra.mxu0 0
    %2345 = vmatprep.subr.bf16.mxu0 0
    %2346 = vmatpush1.bf16.msra.mxu0 0
    %2347 = vmatprep.subr.bf16.mxu0 0
    %2348 = vmatpush1.bf16.msra.mxu0 0
    %2349 = vmatprep.subr.bf16.mxu0 0
    %2350 = vmatpush1.bf16.msra.mxu0 0
    %2351 = vmatprep.subr.bf16.mxu0 0
    %2352 = vmatpush1.bf16.msra.mxu0 %v2335
    %2353 = vmatprep.subr.bf16.mxu0 0
    %2354 = vmatpush2.bf16.msra.mxu0 0
    %2355 = vmatprep.subr.bf16.mxu0 0
    %2356 = vmatpush2.bf16.msra.mxu0 0
    %2357 = vmatprep.subr.bf16.mxu0 0
    %2358 = vmatpush2.bf16.msra.mxu0 0
    %2359 = vmatprep.subr.bf16.mxu0 0
    %2360 = vmatpush2.bf16.msra.mxu0 0
    %2361 = vmatprep.subr.bf16.mxu0 0
    %2362 = vmatpush2.bf16.msra.mxu0 0
    %2363 = vmatprep.subr.bf16.mxu0 0
    %2364 = vmatpush2.bf16.msra.mxu0 0
    %2365 = vmatprep.subr.bf16.mxu0 0
    %2366 = vmatpush2.bf16.msra.mxu0 0
    %2367 = vmatprep.subr.bf16.mxu0 0
    %2368 = vmatpush2.bf16.msra.mxu0 0
    %2369 = vmatprep.mubr.bf16.mxu0 0
    %2370 = vmatmul.mubr.bf16.gmra.mxu0 %v2332
    %v2371 = vpop.f32.mrf.mxu0
    %v2372 = vadd.f32 0.0, %v2371
    %v2373 = vpop.f32.mrf.mxu0
    %v2374 = vpop.f32.mrf.mxu0
    %v2375 = vpop.f32.mrf.mxu0
    %2376 = vdwg.mxu0
    %v2377 = vpack.c.bf16 %v709, %v708
    %v2378 = vld [vmem:[#allocation11] sm:$0xf]
    %v2379 = vld [vmem:[#allocation11 + $0x4] sm:$0xf]
    %v2380 = vld [vmem:[#allocation11 + $0x8] sm:$0xf]
    %v2381 = vld [vmem:[#allocation11 + $0xc] sm:$0xf]
    %v2382 = vld [vmem:[#allocation11 + $0x10] sm:$0xf]
    %v2383 = vld [vmem:[#allocation11 + $0x14] sm:$0xf]
    %v2384 = vld [vmem:[#allocation11 + $0x18] sm:$0xf]
    %v2385 = vld [vmem:[#allocation11 + $0x1c] sm:$0xf]
    %v2386 = vld [vmem:[#allocation11 + $0x20] sm:$0xf]
    %v2387 = vld [vmem:[#allocation11 + $0x24] sm:$0xf]
    %v2388 = vld [vmem:[#allocation11 + $0x28] sm:$0xf]
    %v2389 = vld [vmem:[#allocation11 + $0x2c] sm:$0xf]
    %v2390 = vld [vmem:[#allocation11 + $0x30] sm:$0xf]
    %v2391 = vld [vmem:[#allocation11 + $0x34] sm:$0xf]
    %v2392 = vld [vmem:[#allocation11 + $0x38] sm:$0xf]
    %v2393 = vld [vmem:[#allocation11 + $0x3c] sm:$0xf]
    %v2394 = vpack.c.bf16 %v1532, %v1532
    %v2395 = vpack.c.bf16 %v1588, %v1588
    %v2396 = vpack.c.bf16 %v1644, %v1644
    %v2397 = vpack.c.bf16 %v1700, %v1700
    %v2398 = vpack.c.bf16 %v1756, %v1756
    %v2399 = vpack.c.bf16 %v1812, %v1812
    %v2400 = vpack.c.bf16 %v1868, %v1868
    %v2401 = vpack.c.bf16 %v1924, %v1924
    %v2402 = vpack.c.bf16 %v1980, %v1980
    %v2403 = vpack.c.bf16 %v2036, %v2036
    %v2404 = vpack.c.bf16 %v2092, %v2092
    %v2405 = vpack.c.bf16 %v2148, %v2148
    %v2406 = vpack.c.bf16 %v2204, %v2204
    %v2407 = vpack.c.bf16 %v2260, %v2260
    %v2408 = vpack.c.bf16 %v2316, %v2316
    %v2409 = vpack.c.bf16 %v2372, %v2372
    %v2410 = vld [vmem:[#allocation13] sm:$0xf]
    %v2411 = vld [vmem:[#allocation13 + $0x4] sm:$0xf]
    %v2412 = vld [vmem:[#allocation13 + $0x8] sm:$0xf]
    %v2413 = vld [vmem:[#allocation13 + $0xc] sm:$0xf]
    %v2414 = vld [vmem:[#allocation13 + $0x10] sm:$0xf]
    %v2415 = vld [vmem:[#allocation13 + $0x14] sm:$0xf]
    %v2416 = vld [vmem:[#allocation13 + $0x18] sm:$0xf]
    %v2417 = vld [vmem:[#allocation13 + $0x1c] sm:$0xf]
    %v2418 = vld [vmem:[#allocation13 + $0x20] sm:$0xf]
    %v2419 = vld [vmem:[#allocation13 + $0x24] sm:$0xf]
    %v2420 = vld [vmem:[#allocation13 + $0x28] sm:$0xf]
    %v2421 = vld [vmem:[#allocation13 + $0x2c] sm:$0xf]
    %v2422 = vld [vmem:[#allocation13 + $0x30] sm:$0xf]
    %v2423 = vld [vmem:[#allocation13 + $0x34] sm:$0xf]
    %v2424 = vld [vmem:[#allocation13 + $0x38] sm:$0xf]
    %v2425 = vld [vmem:[#allocation13 + $0x3c] sm:$0xf]
    %v2442 = vunpack.c.l.b16 %v2394
    %v2443 = vunpack.c.l.b16 %v2395
    %v2444 = vunpack.c.l.b16 %v2396
    %v2445 = vunpack.c.l.b16 %v2397
    %v2446 = vunpack.c.l.b16 %v2398
    %v2447 = vunpack.c.l.b16 %v2399
    %v2448 = vunpack.c.l.b16 %v2400
    %v2449 = vunpack.c.l.b16 %v2401
    %v2450 = vunpack.c.l.b16 %v2402
    %v2451 = vunpack.c.l.b16 %v2403
    %v2452 = vunpack.c.l.b16 %v2404
    %v2453 = vunpack.c.l.b16 %v2405
    %v2454 = vunpack.c.l.b16 %v2406
    %v2455 = vunpack.c.l.b16 %v2407
    %v2456 = vunpack.c.l.b16 %v2408
    %v2457 = vunpack.c.l.b16 %v2409
    %v2458 = vrot.slane %v2443, 7
    %v2459 = vsel %vm1054, %v2458, %v2442
    %v2460 = vrot.slane %v2444, 6
    %v2461 = vsel %vm1056, %v2460, %v2459
    %v2462 = vrot.slane %v2445, 5
    %v2463 = vsel %vm1058, %v2462, %v2461
    %v2464 = vrot.slane %v2446, 4
    %v2465 = vsel %vm1060, %v2464, %v2463
    %v2466 = vrot.slane %v2447, 3
    %v2467 = vsel %vm1062, %v2466, %v2465
    %v2468 = vrot.slane %v2448, 2
    %v2469 = vsel %vm1064, %v2468, %v2467
    %v2470 = vrot.slane %v2449, 1
    %v2471 = vsel %vm1066, %v2470, %v2469
    %v2472 = vrot.slane %v2451, 7
    %v2473 = vsel %vm1054, %v2472, %v2450
    %v2474 = vrot.slane %v2452, 6
    %v2475 = vsel %vm1056, %v2474, %v2473
    %v2476 = vrot.slane %v2453, 5
    %v2477 = vsel %vm1058, %v2476, %v2475
    %v2478 = vrot.slane %v2454, 4
    %v2479 = vsel %vm1060, %v2478, %v2477
    %v2480 = vrot.slane %v2455, 3
    %v2481 = vsel %vm1062, %v2480, %v2479
    %v2482 = vrot.slane %v2456, 2
    %v2483 = vsel %vm1064, %v2482, %v2481
    %v2484 = vrot.slane %v2457, 1
    %v2485 = vsel %vm1066, %v2484, %v2483
    %v2486 = vpack.c.b16 %v2485, %v2471
    %v2504 = vunpack.c.l.b16 %v2410
    %v2505 = vunpack.c.l.b16 %v2411
    %v2506 = vunpack.c.l.b16 %v2412
    %v2507 = vunpack.c.l.b16 %v2413
    %v2508 = vunpack.c.l.b16 %v2414
    %v2509 = vunpack.c.l.b16 %v2415
    %v2510 = vunpack.c.l.b16 %v2416
    %v2511 = vunpack.c.l.b16 %v2417
    %v2512 = vunpack.c.l.b16 %v2418
    %v2513 = vunpack.c.l.b16 %v2419
    %v2514 = vunpack.c.l.b16 %v2420
    %v2515 = vunpack.c.l.b16 %v2421
    %v2516 = vunpack.c.l.b16 %v2422
    %v2517 = vunpack.c.l.b16 %v2423
    %v2518 = vunpack.c.l.b16 %v2424
    %v2519 = vunpack.c.l.b16 %v2425
    %v2520 = vpack.c.b16 %v2505, %v2504
    %v2521 = vpack.c.b16 %v2507, %v2506
    %v2522 = vpack.c.b16 %v2509, %v2508
    %v2523 = vpack.c.b16 %v2511, %v2510
    %v2524 = vpack.c.b16 %v2513, %v2512
    %v2525 = vpack.c.b16 %v2515, %v2514
    %v2526 = vpack.c.b16 %v2517, %v2516
    %v2527 = vpack.c.b16 %v2519, %v2518
    %2536 = vmatprep.subr.bf16.mxu0 0
    %2537 = vmatpush1.bf16.msra.mxu0 %v2527
    %2538 = vmatprep.subr.bf16.mxu0 0
    %2539 = vmatpush1.bf16.msra.mxu0 %v2526
    %2540 = vmatprep.subr.bf16.mxu0 0
    %2541 = vmatpush1.bf16.msra.mxu0 %v2525
    %2542 = vmatprep.subr.bf16.mxu0 0
    %2543 = vmatpush1.bf16.msra.mxu0 %v2524
    %2544 = vmatprep.subr.bf16.mxu0 0
    %2545 = vmatpush1.bf16.msra.mxu0 %v2523
    %2546 = vmatprep.subr.bf16.mxu0 0
    %2547 = vmatpush1.bf16.msra.mxu0 %v2522
    %2548 = vmatprep.subr.bf16.mxu0 0
    %2549 = vmatpush1.bf16.msra.mxu0 %v2521
    %2550 = vmatprep.subr.bf16.mxu0 0
    %2551 = vmatpush1.bf16.msra.mxu0 %v2520
    %2552 = vmatprep.subr.bf16.mxu0 0
    %2553 = vmatpush2.bf16.msra.mxu0 0
    %2554 = vmatprep.subr.bf16.mxu0 0
    %2555 = vmatpush2.bf16.msra.mxu0 0
    %2556 = vmatprep.subr.bf16.mxu0 0
    %2557 = vmatpush2.bf16.msra.mxu0 0
    %2558 = vmatprep.subr.bf16.mxu0 0
    %2559 = vmatpush2.bf16.msra.mxu0 0
    %2560 = vmatprep.subr.bf16.mxu0 0
    %2561 = vmatpush2.bf16.msra.mxu0 0
    %2562 = vmatprep.subr.bf16.mxu0 0
    %2563 = vmatpush2.bf16.msra.mxu0 0
    %2564 = vmatprep.subr.bf16.mxu0 0
    %2565 = vmatpush2.bf16.msra.mxu0 0
    %2566 = vmatprep.subr.bf16.mxu0 0
    %2567 = vmatpush2.bf16.msra.mxu0 0
    %2568 = vmatprep.mubr.bf16.mxu0 0
    %2569 = vmatmul.mubr.bf16.gmra.mxu0 %v2486
    %v2570 = vpop.f32.mrf.mxu0
    %v2571 = vadd.f32 0.0, %v2570
    %v2572 = vpop.f32.mrf.mxu0
    %v2573 = vpop.f32.mrf.mxu0
    %v2574 = vadd.f32 0.0, %v2573
    %v2575 = vpop.f32.mrf.mxu0
    %2576 = vdwg.mxu0
    %v2593 = vunpack.c.l.b16 %v2378
    %v2594 = vunpack.c.l.b16 %v2379
    %v2595 = vunpack.c.l.b16 %v2380
    %v2596 = vunpack.c.l.b16 %v2381
    %v2597 = vunpack.c.l.b16 %v2382
    %v2598 = vunpack.c.l.b16 %v2383
    %v2599 = vunpack.c.l.b16 %v2384
    %v2600 = vunpack.c.l.b16 %v2385
    %v2601 = vunpack.c.l.b16 %v2386
    %v2602 = vunpack.c.l.b16 %v2387
    %v2603 = vunpack.c.l.b16 %v2388
    %v2604 = vunpack.c.l.b16 %v2389
    %v2605 = vunpack.c.l.b16 %v2390
    %v2606 = vunpack.c.l.b16 %v2391
    %v2607 = vunpack.c.l.b16 %v2392
    %v2608 = vunpack.c.l.b16 %v2393
    %v2609 = vpack.c.b16 %v2594, %v2593
    %v2610 = vpack.c.b16 %v2596, %v2595
    %v2611 = vpack.c.b16 %v2598, %v2597
    %v2612 = vpack.c.b16 %v2600, %v2599
    %v2613 = vpack.c.b16 %v2602, %v2601
    %v2614 = vpack.c.b16 %v2604, %v2603
    %v2615 = vpack.c.b16 %v2606, %v2605
    %v2616 = vpack.c.b16 %v2608, %v2607
    %2625 = vmatprep.subr.bf16.mxu0 0
    %2626 = vmatpush1.bf16.msra.mxu0 %v2616
    %2627 = vmatprep.subr.bf16.mxu0 0
    %2628 = vmatpush1.bf16.msra.mxu0 %v2615
    %2629 = vmatprep.subr.bf16.mxu0 0
    %2630 = vmatpush1.bf16.msra.mxu0 %v2614
    %2631 = vmatprep.subr.bf16.mxu0 0
    %2632 = vmatpush1.bf16.msra.mxu0 %v2613
    %2633 = vmatprep.subr.bf16.mxu0 0
    %2634 = vmatpush1.bf16.msra.mxu0 %v2612
    %2635 = vmatprep.subr.bf16.mxu0 0
    %2636 = vmatpush1.bf16.msra.mxu0 %v2611
    %2637 = vmatprep.subr.bf16.mxu0 0
    %2638 = vmatpush1.bf16.msra.mxu0 %v2610
    %2639 = vmatprep.subr.bf16.mxu0 0
    %2640 = vmatpush1.bf16.msra.mxu0 %v2609
    %2641 = vmatprep.subr.bf16.mxu0 0
    %2642 = vmatpush2.bf16.msra.mxu0 0
    %2643 = vmatprep.subr.bf16.mxu0 0
    %2644 = vmatpush2.bf16.msra.mxu0 0
    %2645 = vmatprep.subr.bf16.mxu0 0
    %2646 = vmatpush2.bf16.msra.mxu0 0
    %2647 = vmatprep.subr.bf16.mxu0 0
    %2648 = vmatpush2.bf16.msra.mxu0 0
    %2649 = vmatprep.subr.bf16.mxu0 0
    %2650 = vmatpush2.bf16.msra.mxu0 0
    %2651 = vmatprep.subr.bf16.mxu0 0
    %2652 = vmatpush2.bf16.msra.mxu0 0
    %2653 = vmatprep.subr.bf16.mxu0 0
    %2654 = vmatpush2.bf16.msra.mxu0 0
    %2655 = vmatprep.subr.bf16.mxu0 0
    %2656 = vmatpush2.bf16.msra.mxu0 0
    %2657 = vmatprep.mubr.bf16.mxu0 0
    %2658 = vmatmul.mubr.bf16.gmra.mxu0 %v2377
    %v2659 = vpop.f32.mrf.mxu0
    %v2660 = vadd.f32 %v2571, %v2659
    %v2661 = vpop.f32.mrf.mxu0
    %v2662 = vpop.f32.mrf.mxu0
    %v2663 = vadd.f32 %v2574, %v2662
    %v2664 = vpop.f32.mrf.mxu0
    %2665 = vdwg.mxu0
    %v2666 = vld [vmem:[%s9] sm:$0x1]
    %v2668 = vlaneseq
    %v2669 = vshrl.u32 %v2668, 7
    %v2670 = vsub.s32 0, %v2669
    %v2671 = vrot.slane %v2666, %v2670
    %v2673 = vadd.f32 %v2660, %v2671
    %v2674 = vadd.f32 %v2663, %v2671
    %v2675 = vtanh.pop %v2673
    %v2676 = vtanh.pop %v2674
    %v2677 = vpack.c.bf16 %v2676, %v2675
    %v2679 = vunpack.c.l.b16 %v2677
    %v2680 = vunpack.c.h.b16 %v2677
    %v2681 = vpack.c.b16 %v2679, %v2679
    %v2682 = vpack.c.b16 %v2680, %v2680
    %2685 = vst [vmem:[#allocation14] sm:$0xf] %v2681
    %2686 = vst [vmem:[#allocation14 + $0x4] sm:$0xf] %v2682
    // Predicated region
    $region70: #{tpu_custom_call.1} parent=1 // pred_check
      _
    $region71: #{tpu_custom_call.1} parent=1 // pred_check_branch
      %2688 = sbr.rel (0) target = $region73
    $region72: #{tpu_custom_call.1} parent=1 // pred_region
      %s2690 = ssub.s32 128, 128
      %2691 = vsyncadd [#allocation4], %s2690
      %s2692 = sshll.u32 [#allocation14], 4
      %s2693 = int_to_ptr.vmem [resolvable:$true] %s2692
      %2698 = dma.vmem_to_hbm [thread:$0]  %s2693, 128, %s10, [#allocation4], 64, 64, 4
    $region73: #{tpu_custom_call.1} parent=1 // pred_fallthru
      _
    // Predicated region
    $region74: #{tpu_custom_call.1} parent=1 // pred_check
      _
    $region75: #{tpu_custom_call.1} parent=1 // pred_check_branch
      %2700 = sbr.rel (0) target = $region77
    $region76: #{tpu_custom_call.1} parent=1 // pred_region
      %s2702 = ssub.s32 256, 256
      %2703 = vsyncadd [#allocation16], %s2702
      %s2704 = sshll.u32 [#allocation15], 4
      %s2705 = int_to_ptr.vmem [resolvable:$true] %s2704
      %2710 = dma.vmem_to_hbm [thread:$0]  %s2705, 256, %s11, [#allocation16], 128, 128, 8
    $region77: #{tpu_custom_call.1} parent=1 // pred_fallthru
      _
    // Predicated region
    $region78: #{tpu_custom_call.1} parent=1 // pred_check
      _
    $region79: #{tpu_custom_call.1} parent=1 // pred_check_branch
      %2712 = sbr.rel (0) target = $region81
    $region80: #{tpu_custom_call.1} parent=1 // pred_region
      %2713 = dma.done [#allocation4], 128
    $region81: #{tpu_custom_call.1} parent=1 // pred_fallthru
      _
    // Predicated region
    $region82: #{tpu_custom_call.1} parent=1 // pred_check
      _
    $region83: #{tpu_custom_call.1} parent=1 // pred_check_branch
      %2715 = sbr.rel (0) target = $region85
    $region84: #{tpu_custom_call.1} parent=1 // pred_region
      %2716 = dma.done [#allocation16], 256
    $region85: #{tpu_custom_call.1} parent=1 // pred_fallthru
      _
    %2717 = vsyncpa [#allocation3], 1
    %2718 = vsyncpa [#allocation6], 1
    %2719 = vsyncpa [#allocation9], 1
    %2720 = vsyncpa [#allocation12], 1
    %2721 = vsyncpa [#allocation4], 1
    %2722 = vsyncpa [#allocation16], 1

</llo_original>
